<compile_context>
chip_gen: v6e
topology: v6e:2x2x1
jax: 0.10.0
libtpu: 0.0.40
codegen_flags: <defaults>
</compile_context>

<pallas_src>
import jax
import jax.numpy as jnp
from jax.experimental import pallas as pl
from jax.experimental.pallas import tpu as pltpu

# ---- small, lane-aligned GPT-NeoX-style config (eval mode) -----------------
B = 2
T = 128
N_EMBD = 128
INTERMEDIATE = 4 * N_EMBD      # GPT-NeoX intermediate_size = 4 * n_embd
TM = 128                       # token-tile rows per grid step

_SQRT_HALF = 0.7071067811865476


def _erf_f32(x):
    # Rational-polynomial erf for f32 (same coefficients XLA/Eigen use);
    # accurate to a few f32 ulps, so GELU matches torch's exact (erf) GELU.
    x = jnp.clip(x, -4.0, 4.0)
    x2 = x * x
    alpha = (0.00022905065861350646, 0.0034082910107109506,
             0.050955695062380861, 0.18520832239976145, 1.128379143519084)
    beta = (-1.1791602954361697e-07, 2.3547966471313185e-05,
            0.0010179625278914885, 0.014070470171167667,
            0.11098505178285362, 0.49746925110067538, 1.0)
    p = jnp.float32(alpha[0]) * x2 + alpha[1]
    for c in alpha[2:]:
        p = p * x2 + c
    q = jnp.float32(beta[0]) * x2 + beta[1]
    for c in beta[2:]:
        q = q * x2 + c
    return x * p / q


def _gelu_exact(x):
    # torch.nn.functional.gelu default ('none' approximation): x * Phi(x).
    return 0.5 * x * (1.0 + _erf_f32(x * _SQRT_HALF))


# ------------------------------- Pallas kernel -------------------------------
def gptneox_mlp_kernel(x_ref, w_fc_ref, b_fc_ref, w_proj_ref, b_proj_ref,
                       out_ref):
    x = x_ref[...].astype(jnp.bfloat16)                       # (TM, C)
    h = jnp.dot(x, w_fc_ref[...],
                preferred_element_type=jnp.float32)           # (TM, I), f32 acc
    h = h + b_fc_ref[...]                                     # f32 bias add
    h = _gelu_exact(h)                                        # exact GELU, f32
    y = jnp.dot(h.astype(jnp.bfloat16), w_proj_ref[...],
                preferred_element_type=jnp.float32)           # (TM, C), f32 acc
    y = y + b_proj_ref[...]
    out_ref[...] = y.astype(out_ref.dtype)


def gptneox_mlp_forward(x, params):
    """x: (B, T, n_embd) float32 -> (B, T, n_embd) float32."""
    b, t, c = x.shape
    m = b * t
    assert m % TM == 0 and c == N_EMBD
    x2 = x.reshape(m, c)                                      # lane-dense slab

    const = lambda arr: pl.BlockSpec(arr.shape, lambda i: (0, 0))
    out = pl.pallas_call(
        gptneox_mlp_kernel,
        out_shape=jax.ShapeDtypeStruct((m, c), x.dtype),
        grid=(m // TM,),
        in_specs=[
            pl.BlockSpec((TM, c), lambda i: (i, 0)),          # token tile
            const(params["w_fc"]), const(params["b_fc"]),     # resident weights
            const(params["w_proj"]), const(params["b_proj"]),
        ],
        out_specs=pl.BlockSpec((TM, c), lambda i: (i, 0)),
        compiler_params=pltpu.CompilerParams(
            dimension_semantics=("parallel",)),
    )(x2, params["w_fc"], params["b_fc"], params["w_proj"], params["b_proj"])
    return out.reshape(b, t, c)


# ----------------------------- pure-JAX reference -----------------------------
def ref_mlp(x, p):
    xb = x.astype(jnp.bfloat16)
    h = jnp.dot(xb, p["w_fc"], preferred_element_type=jnp.float32) + p["b_fc"][0]
    h = jax.nn.gelu(h, approximate=False)      # torch F.gelu default (exact erf)
    y = jnp.dot(h.astype(jnp.bfloat16), p["w_proj"],
                preferred_element_type=jnp.float32) + p["b_proj"][0]
    return y


# ------------------------------- parameter init -------------------------------
def init_params(key):
    k1, k2, k3, k4 = jax.random.split(key, 4)
    w_fc = 0.02 * jax.random.normal(k1, (N_EMBD, INTERMEDIATE), jnp.float32)
    b_fc = 0.01 * jax.random.normal(k2, (1, INTERMEDIATE), jnp.float32)
    w_proj = 0.02 * jax.random.normal(k3, (INTERMEDIATE, N_EMBD), jnp.float32)
    b_proj = 0.01 * jax.random.normal(k4, (1, N_EMBD), jnp.float32)
    return {
        "w_fc": w_fc.astype(jnp.bfloat16),     # (in, out) layout, bf16 MXU path
        "b_fc": b_fc,                          # biases stay f32
        "w_proj": w_proj.astype(jnp.bfloat16),
        "b_proj": b_proj,
    }


# TODO(synk): at production sizes (n_embd=2048+, intermediate=8192+) the
# full-resident weights would need a K/N-tiled grid with a VMEM f32 accumulator
# (init/finalize via pl.when) to stay under the 64 MiB VMEM budget on v7x.

if __name__ == "__main__":
    key = jax.random.PRNGKey(0)
    k_x, k_p = jax.random.split(key)
    x = jax.random.normal(k_x, (B, T, N_EMBD), jnp.float32)
    params = init_params(k_p)

    out = jax.block_until_ready(gptneox_mlp_forward(x, params))
    expected = ref_mlp(x, params)
    assert out.shape == (B, T, N_EMBD)
    max_err = float(jnp.max(jnp.abs(out - expected)))
    assert jnp.allclose(out, expected, rtol=1e-3, atol=1e-3), max_err
    print("KERNEL_OK")
</pallas_src>

<mosaic_0001>
module attributes {stable_mosaic.version = 11 : i64} {
  func.func @gptneox_mlp_kernel(%arg0: i32, %arg1: memref<128x128xf32, #tpu.memory_space<vmem>>, %arg2: memref<128x512xbf16, #tpu.memory_space<vmem>>, %arg3: memref<1x512xf32, #tpu.memory_space<vmem>>, %arg4: memref<512x128xbf16, #tpu.memory_space<vmem>>, %arg5: memref<1x128xf32, #tpu.memory_space<vmem>>, %arg6: memref<128x128xf32, #tpu.memory_space<vmem>>) attributes {dimension_semantics = [#tpu.dimension_semantics<parallel>], iteration_bounds = array<i64: 2>, scalar_prefetch = 0 : i64, scratch_operands = 0 : i64, tpu.core_type = #tpu.core_type<tc>, window_params = [{transform_indices = @transform_0, window_bounds = array<i64: 128, 128>}, {pipeline_mode = #tpu.pipeline_mode<synchronous>, transform_indices = @transform_1, window_bounds = array<i64: 128, 512>}, {pipeline_mode = #tpu.pipeline_mode<synchronous>, transform_indices = @transform_2, window_bounds = array<i64: 1, 512>}, {pipeline_mode = #tpu.pipeline_mode<synchronous>, transform_indices = @transform_3, window_bounds = array<i64: 512, 128>}, {pipeline_mode = #tpu.pipeline_mode<synchronous>, transform_indices = @transform_4, window_bounds = array<i64: 1, 128>}, {transform_indices = @transform_5, window_bounds = array<i64: 128, 128>}]} {
    %c0 = arith.constant 0 : index
    %c0_0 = arith.constant 0 : index
    %0 = vector.load %arg1[%c0, %c0_0] : memref<128x128xf32, #tpu.memory_space<vmem>>, vector<128x128xf32>
    %1 = arith.truncf %0 : vector<128x128xf32> to vector<128x128xbf16>
    %c0_1 = arith.constant 0 : index
    %c0_2 = arith.constant 0 : index
    %2 = vector.load %arg2[%c0_1, %c0_2] : memref<128x512xbf16, #tpu.memory_space<vmem>>, vector<128x512xbf16>
    %cst = arith.constant dense<0.000000e+00> : vector<128x512xf32>
    %3 = tpu.matmul %1, %2, %cst {dimension_numbers = #tpu.dot_dimension_numbers<[1], [0], [0], [1], [0, 0, 1, 1], [], []>} : vector<128x128xbf16>, vector<128x512xbf16>, vector<128x512xf32> -> vector<128x512xf32>
    %c0_3 = arith.constant 0 : index
    %c0_4 = arith.constant 0 : index
    %4 = vector.load %arg3[%c0_3, %c0_4] : memref<1x512xf32, #tpu.memory_space<vmem>>, vector<1x512xf32>
    %5 = vector.broadcast %4 : vector<1x512xf32> to vector<128x512xf32>
    %6 = arith.addf %3, %5 : vector<128x512xf32>
    %cst_5 = arith.constant 5.000000e-01 : f32
    %7 = vector.broadcast %cst_5 : f32 to vector<128x512xf32>
    %8 = arith.mulf %7, %6 : vector<128x512xf32>
    %cst_6 = arith.constant 0.707106769 : f32
    %9 = vector.broadcast %cst_6 : f32 to vector<128x512xf32>
    %10 = arith.mulf %6, %9 : vector<128x512xf32>
    %cst_7 = arith.constant -4.000000e+00 : f32
    %cst_8 = arith.constant 4.000000e+00 : f32
    %11 = vector.broadcast %cst_7 : f32 to vector<128x512xf32>
    %12 = arith.maximumf %11, %10 : vector<128x512xf32>
    %13 = vector.broadcast %cst_8 : f32 to vector<128x512xf32>
    %14 = arith.minimumf %13, %12 : vector<128x512xf32>
    %15 = arith.mulf %14, %14 : vector<128x512xf32>
    %cst_9 = arith.constant 2.29050653E-4 : f32
    %16 = vector.broadcast %cst_9 : f32 to vector<128x512xf32>
    %17 = arith.mulf %16, %15 : vector<128x512xf32>
    %cst_10 = arith.constant 0.00340829091 : f32
    %18 = vector.broadcast %cst_10 : f32 to vector<128x512xf32>
    %19 = arith.addf %17, %18 : vector<128x512xf32>
    %20 = arith.mulf %19, %15 : vector<128x512xf32>
    %cst_11 = arith.constant 0.0509556942 : f32
    %21 = vector.broadcast %cst_11 : f32 to vector<128x512xf32>
    %22 = arith.addf %20, %21 : vector<128x512xf32>
    %23 = arith.mulf %22, %15 : vector<128x512xf32>
    %cst_12 = arith.constant 0.185208321 : f32
    %24 = vector.broadcast %cst_12 : f32 to vector<128x512xf32>
    %25 = arith.addf %23, %24 : vector<128x512xf32>
    %26 = arith.mulf %25, %15 : vector<128x512xf32>
    %cst_13 = arith.constant 1.12837911 : f32
    %27 = vector.broadcast %cst_13 : f32 to vector<128x512xf32>
    %28 = arith.addf %26, %27 : vector<128x512xf32>
    %cst_14 = arith.constant -1.17916031E-7 : f32
    %29 = vector.broadcast %cst_14 : f32 to vector<128x512xf32>
    %30 = arith.mulf %29, %15 : vector<128x512xf32>
    %cst_15 = arith.constant 2.35479656E-5 : f32
    %31 = vector.broadcast %cst_15 : f32 to vector<128x512xf32>
    %32 = arith.addf %30, %31 : vector<128x512xf32>
    %33 = arith.mulf %32, %15 : vector<128x512xf32>
    %cst_16 = arith.constant 0.00101796258 : f32
    %34 = vector.broadcast %cst_16 : f32 to vector<128x512xf32>
    %35 = arith.addf %33, %34 : vector<128x512xf32>
    %36 = arith.mulf %35, %15 : vector<128x512xf32>
    %cst_17 = arith.constant 0.0140704699 : f32
    %37 = vector.broadcast %cst_17 : f32 to vector<128x512xf32>
    %38 = arith.addf %36, %37 : vector<128x512xf32>
    %39 = arith.mulf %38, %15 : vector<128x512xf32>
    %cst_18 = arith.constant 0.110985048 : f32
    %40 = vector.broadcast %cst_18 : f32 to vector<128x512xf32>
    %41 = arith.addf %39, %40 : vector<128x512xf32>
    %42 = arith.mulf %41, %15 : vector<128x512xf32>
    %cst_19 = arith.constant 0.497469246 : f32
    %43 = vector.broadcast %cst_19 : f32 to vector<128x512xf32>
    %44 = arith.addf %42, %43 : vector<128x512xf32>
    %45 = arith.mulf %44, %15 : vector<128x512xf32>
    %cst_20 = arith.constant 1.000000e+00 : f32
    %46 = vector.broadcast %cst_20 : f32 to vector<128x512xf32>
    %47 = arith.addf %45, %46 : vector<128x512xf32>
    %48 = arith.mulf %14, %28 : vector<128x512xf32>
    %49 = arith.divf %48, %47 : vector<128x512xf32>
    %cst_21 = arith.constant 1.000000e+00 : f32
    %50 = vector.broadcast %cst_21 : f32 to vector<128x512xf32>
    %51 = arith.addf %50, %49 : vector<128x512xf32>
    %52 = arith.mulf %8, %51 : vector<128x512xf32>
    %53 = arith.truncf %52 : vector<128x512xf32> to vector<128x512xbf16>
    %c0_22 = arith.constant 0 : index
    %c0_23 = arith.constant 0 : index
    %54 = vector.load %arg4[%c0_22, %c0_23] : memref<512x128xbf16, #tpu.memory_space<vmem>>, vector<512x128xbf16>
    %cst_24 = arith.constant dense<0.000000e+00> : vector<128x128xf32>
    %55 = tpu.matmul %53, %54, %cst_24 {dimension_numbers = #tpu.dot_dimension_numbers<[1], [0], [0], [1], [0, 0, 1, 1], [], []>} : vector<128x512xbf16>, vector<512x128xbf16>, vector<128x128xf32> -> vector<128x128xf32>
    %c0_25 = arith.constant 0 : index
    %c0_26 = arith.constant 0 : index
    %56 = vector.load %arg5[%c0_25, %c0_26] : memref<1x128xf32, #tpu.memory_space<vmem>>, vector<1x128xf32>
    %57 = vector.broadcast %56 : vector<1x128xf32> to vector<128x128xf32>
    %58 = arith.addf %55, %57 : vector<128x128xf32>
    %c0_27 = arith.constant 0 : index
    %c0_28 = arith.constant 0 : index
    %59 = vector.load %arg6[%c0_27, %c0_28] : memref<128x128xf32, #tpu.memory_space<vmem>>, vector<128x128xf32>
    tpu.vector_store %arg6[%c0_27, %c0_28], %58 {strides = array<i32>} : memref<128x128xf32, #tpu.memory_space<vmem>>, vector<128x128xf32>,
    return
  }
  func.func @transform_0(%arg0: i32) -> (i32, i32) {
    %c0_i32 = arith.constant 0 : i32
    %c0_i32_0 = arith.constant 0 : i32
    return %arg0, %c0_i32 : i32, i32
  }
  func.func @transform_1(%arg0: i32) -> (i32, i32) {
    %c0_i32 = arith.constant 0 : i32
    %c0_i32_0 = arith.constant 0 : i32
    %c0_i32_1 = arith.constant 0 : i32
    return %c0_i32, %c0_i32_0 : i32, i32
  }
  func.func @transform_2(%arg0: i32) -> (i32, i32) {
    %c0_i32 = arith.constant 0 : i32
    %c0_i32_0 = arith.constant 0 : i32
    %c0_i32_1 = arith.constant 0 : i32
    return %c0_i32, %c0_i32_0 : i32, i32
  }
  func.func @transform_3(%arg0: i32) -> (i32, i32) {
    %c0_i32 = arith.constant 0 : i32
    %c0_i32_0 = arith.constant 0 : i32
    %c0_i32_1 = arith.constant 0 : i32
    return %c0_i32, %c0_i32_0 : i32, i32
  }
  func.func @transform_4(%arg0: i32) -> (i32, i32) {
    %c0_i32 = arith.constant 0 : i32
    %c0_i32_0 = arith.constant 0 : i32
    %c0_i32_1 = arith.constant 0 : i32
    return %c0_i32, %c0_i32_0 : i32, i32
  }
  func.func @transform_5(%arg0: i32) -> (i32, i32) {
    %c0_i32 = arith.constant 0 : i32
    %c0_i32_0 = arith.constant 0 : i32
    return %arg0, %c0_i32 : i32, i32
  }
}

</mosaic_0001>

<llo_original>
// kernel: tpu_custom_call.1
$region0: #{tpu_custom_call.1}
  #allocation0 [shape = 'u32[]', space=smem, size = 0x4, offset = 0x4, fixed_abs, tag = 'smem constant byte address 0x4 - core index']
  #allocation1 [shape = 'u32[144,128]{1,0:T(1,128)}', space=vmem, size = 0x12000, scoped, tag = 'internal scratch']
  %s0 = inlined_call_operand.hbm [shape: f32[256,128], index: 0, kind: input, shape index: {}]
  %s1 = inlined_call_operand.hbm [shape: bf16[128,512], index: 1, kind: input, shape index: {}]
  %s2 = inlined_call_operand.hbm [shape: f32[1,512], index: 2, kind: input, shape index: {}]
  %s3 = inlined_call_operand.hbm [shape: bf16[512,128], index: 3, kind: input, shape index: {}]
  %s4 = inlined_call_operand.vmem [shape: f32[1,128], index: 4, kind: input, shape index: {}]
  %s5 = inlined_call_operand.hbm [shape: f32[256,128], index: 5, kind: output, shape index: {}]
  %s6 = sld [smem:[#allocation0]]
  $region69: #{tpu_custom_call.1} parent=0
    _
  %s8 = ssub.s32 1, %s6
  %s9 = scalar_select 0, %s8, %s6
  $region1: #{tpu_custom_call.1} parent=0
    #allocation2 [shape = 'u8[131072]{0}', space=vmem, size = 0x20000, scoped, tag = 'input window, operand 0']
    #allocation3 [shape = 's32[2]{0}', space=sflag, size = 0x8, scoped, tag = 'scoped memory for tpu_custom_call.1']
    #allocation4 [shape = 's32[2]{0}', space=sflag, size = 0x8, scoped, tag = 'scoped memory for tpu_custom_call.1']
    #allocation5 [shape = 'u8[131072]{0}', space=vmem, size = 0x20000, scoped, tag = 'input window, operand 1, single buffered']
    #allocation6 [shape = 's32[1]{0}', space=sflag, size = 0x4, scoped, tag = 'scoped memory for tpu_custom_call.1']
    #allocation7 [shape = 'u8[2048]{0}', space=vmem, size = 0x800, scoped, tag = 'input window, operand 2, single buffered']
    #allocation8 [shape = 'u8[131072]{0}', space=vmem, size = 0x20000, scoped, tag = 'input window, operand 3, single buffered']
    #allocation9 [shape = 's32[1]{0}', space=sflag, size = 0x4, scoped, tag = 'scoped memory for tpu_custom_call.1']
    #allocation10 [shape = 'u8[131072]{0}', space=vmem, size = 0x20000, scoped, tag = 'output window, operand 0']
    %10 = vsyncpa [#allocation3], 0
    %s11 = scalar_lea.sflag [#allocation3], 1
    %12 = vsyncpa %s11, 0
    %13 = vsyncpa [#allocation6], 0
    %14 = vsyncpa [#allocation9], 0
    %15 = vsyncpa [#allocation4], 0
    %s16 = scalar_lea.sflag [#allocation4], 1
    %17 = vsyncpa %s16, 0
    loop: start=0, step=1, limit=4
    $region2: #{tpu_custom_call.1} parent=1 // loop_pre_header
      _
    $region3: #{tpu_custom_call.1} parent=1 // loop_header
      %s19 = sphi 0, %s23
      %p20 = scmp.ge.s32.totalorder %s19, 4
      %s29 = sphi 0, %s31
      %s32 = sphi 0, %s29
      %s33 = sphi 0, %s32
      %s49 = sphi 0, %s33
      %s53 = sphi 0, %s53
      %s55 = sphi 0, %s53
      %s56 = sphi 0, %s55
      %s70 = sphi 0, %s56
      %s74 = sphi 0, %s74
      %s76 = sphi 0, %s74
      %s77 = sphi 0, %s76
      %s91 = sphi 0, %s77
      %s95 = sphi 0, %s95
      %s97 = sphi 0, %s95
      %s98 = sphi 0, %s97
      %s112 = sphi 0, %s98
      %s116 = sphi 0, %s116
      %s118 = sphi 0, %s116
      %s119 = sphi 0, %s118
      %s133 = sphi 0, %s119
      %s139 = sphi 0, %s141
      %s142 = sphi 0, %s139
      %s143 = sphi 0, %s142
      %s159 = sphi 0, %s143
    $region4: #{tpu_custom_call.1} parent=1 // loop_header_branch
      %22 = sbr.rel (%p20) target = $region8
    $region5: #{tpu_custom_call.1} parent=1 // loop_body
      %s24 = ssub.s32 %s19, 1
      %s25 = ssub.s32 %s19, 2
      %s26 = sadd.s32 %s19, 1
      %s27 = ssub.s32 %s19, %s26
      %p28 = scmp.eq.s32.totalorder %s27, 0
      %s30 = sadd.s32 %s29, 1
      %s31 = scalar_select %p28, %s29, %s30
      %p34 = pneg %p28
      %p35 = scmp.eq.s32.totalorder %s19, 1
      %p36 = por %p34, %p35
      %p37 = scmp.ne.s32.totalorder %s29, %s32
      %p38 = scmp.eq.s32.totalorder %s19, 0
      %p39 = por %p37, %p38
      %p40 = scmp.ne.s32.totalorder %s29, %s32
      %p41 = scmp.eq.s32.totalorder %s24, 1
      %p42 = por %p40, %p41
      %p43 = scmp.ne.s32.totalorder %s32, %s33
      %p44 = scmp.eq.s32.totalorder %s24, 0
      %p45 = por %p43, %p44
      %p46 = scmp.ne.s32.totalorder %s32, %s33
      %p47 = scmp.eq.s32.totalorder %s25, 1
      %p48 = por %p46, %p47
      %p50 = scmp.ne.s32.totalorder %s33, %s49
      %p51 = scmp.eq.s32.totalorder %s25, 0
      %p52 = por %p50, %p51
      %s54 = sadd.s32 %s53, 1
      %p57 = scmp.eq.s32.totalorder %s19, 1
      %p58 = scmp.ne.s32.totalorder %s53, %s55
      %p59 = scmp.eq.s32.totalorder %s19, 0
      %p60 = por %p58, %p59
      %p61 = scmp.ne.s32.totalorder %s53, %s55
      %p62 = scmp.eq.s32.totalorder %s24, 1
      %p63 = por %p61, %p62
      %p64 = scmp.ne.s32.totalorder %s55, %s56
      %p65 = scmp.eq.s32.totalorder %s24, 0
      %p66 = por %p64, %p65
      %p67 = scmp.ne.s32.totalorder %s55, %s56
      %p68 = scmp.eq.s32.totalorder %s25, 1
      %p69 = por %p67, %p68
      %p71 = scmp.ne.s32.totalorder %s56, %s70
      %p72 = scmp.eq.s32.totalorder %s25, 0
      %p73 = por %p71, %p72
      %s75 = sadd.s32 %s74, 1
      %p78 = scmp.eq.s32.totalorder %s19, 1
      %p79 = scmp.ne.s32.totalorder %s74, %s76
      %p80 = scmp.eq.s32.totalorder %s19, 0
      %p81 = por %p79, %p80
      %p82 = scmp.ne.s32.totalorder %s74, %s76
      %p83 = scmp.eq.s32.totalorder %s24, 1
      %p84 = por %p82, %p83
      %p85 = scmp.ne.s32.totalorder %s76, %s77
      %p86 = scmp.eq.s32.totalorder %s24, 0
      %p87 = por %p85, %p86
      %p88 = scmp.ne.s32.totalorder %s76, %s77
      %p89 = scmp.eq.s32.totalorder %s25, 1
      %p90 = por %p88, %p89
      %p92 = scmp.ne.s32.totalorder %s77, %s91
      %p93 = scmp.eq.s32.totalorder %s25, 0
      %p94 = por %p92, %p93
      %s96 = sadd.s32 %s95, 1
      %p99 = scmp.eq.s32.totalorder %s19, 1
      %p100 = scmp.ne.s32.totalorder %s95, %s97
      %p101 = scmp.eq.s32.totalorder %s19, 0
      %p102 = por %p100, %p101
      %p103 = scmp.ne.s32.totalorder %s95, %s97
      %p104 = scmp.eq.s32.totalorder %s24, 1
      %p105 = por %p103, %p104
      %p106 = scmp.ne.s32.totalorder %s97, %s98
      %p107 = scmp.eq.s32.totalorder %s24, 0
      %p108 = por %p106, %p107
      %p109 = scmp.ne.s32.totalorder %s97, %s98
      %p110 = scmp.eq.s32.totalorder %s25, 1
      %p111 = por %p109, %p110
      %p113 = scmp.ne.s32.totalorder %s98, %s112
      %p114 = scmp.eq.s32.totalorder %s25, 0
      %p115 = por %p113, %p114
      %s117 = sadd.s32 %s116, 1
      %p120 = scmp.eq.s32.totalorder %s19, 1
      %p121 = scmp.ne.s32.totalorder %s116, %s118
      %p122 = scmp.eq.s32.totalorder %s19, 0
      %p123 = por %p121, %p122
      %p124 = scmp.ne.s32.totalorder %s116, %s118
      %p125 = scmp.eq.s32.totalorder %s24, 1
      %p126 = por %p124, %p125
      %p127 = scmp.ne.s32.totalorder %s118, %s119
      %p128 = scmp.eq.s32.totalorder %s24, 0
      %p129 = por %p127, %p128
      %p130 = scmp.ne.s32.totalorder %s118, %s119
      %p131 = scmp.eq.s32.totalorder %s25, 1
      %p132 = por %p130, %p131
      %p134 = scmp.ne.s32.totalorder %s119, %s133
      %p135 = scmp.eq.s32.totalorder %s25, 0
      %p136 = por %p134, %p135
      %s137 = ssub.s32 %s19, %s26
      %p138 = scmp.eq.s32.totalorder %s137, 0
      %s140 = sadd.s32 %s139, 1
      %s141 = scalar_select %p138, %s139, %s140
      %p144 = pneg %p138
      %p145 = scmp.eq.s32.totalorder %s19, 1
      %p146 = por %p144, %p145
      %p147 = scmp.ne.s32.totalorder %s139, %s142
      %p148 = scmp.eq.s32.totalorder %s19, 0
      %p149 = por %p147, %p148
      %p150 = scmp.ne.s32.totalorder %s139, %s142
      %p151 = scmp.eq.s32.totalorder %s24, 1
      %p152 = por %p150, %p151
      %p153 = scmp.ne.s32.totalorder %s142, %s143
      %p154 = scmp.eq.s32.totalorder %s24, 0
      %p155 = por %p153, %p154
      %p156 = scmp.ne.s32.totalorder %s142, %s143
      %p157 = scmp.eq.s32.totalorder %s25, 1
      %p158 = por %p156, %p157
      %p160 = scmp.ne.s32.totalorder %s143, %s159
      %p161 = scmp.eq.s32.totalorder %s25, 0
      %p162 = por %p160, %p161
      %p163 = scmp.le.s32.totalorder 1, %s19
      %p164 = scmp.lt.s32.totalorder %s19, 3
      %p165 = pnand %p163, %p164
      %p166 = pneg %p165
      // Predicated region
      $region9: #{tpu_custom_call.1} parent=5 // pred_check
        _
      $region10: #{tpu_custom_call.1} parent=5 // pred_check_branch
        %168 = sbr.rel (%p165) target = $region12
      $region11: #{tpu_custom_call.1} parent=5 // pred_region
        %s169 = ssub.s32 %s19, 1
        // Predicated region
        $region13: #{tpu_custom_call.1} parent=11 // pred_check
          %p170 = pneg %p66
        $region14: #{tpu_custom_call.1} parent=11 // pred_check_branch
          %172 = sbr.rel (%p170) target = $region16
        $region15: #{tpu_custom_call.1} parent=11 // pred_region
          %s174 = ssub.s32 4096, 4096
          %175 = vsyncadd [#allocation6], %s174
          %s176 = sshll.u32 [#allocation5], 4
          %s177 = int_to_ptr.vmem [resolvable:$true] %s176
          %182 = dma.hbm_to_vmem [thread:$0]  %s1, 4096, %s177, [#allocation6], 256, 256, 16
        $region16: #{tpu_custom_call.1} parent=11 // pred_fallthru
          _
        // Predicated region
        $region17: #{tpu_custom_call.1} parent=11 // pred_check
          %p183 = pneg %p87
        $region18: #{tpu_custom_call.1} parent=11 // pred_check_branch
          %185 = sbr.rel (%p183) target = $region20
        $region19: #{tpu_custom_call.1} parent=11 // pred_region
          %s187 = ssub.s32 64, 64
          %188 = vsyncadd [#allocation6], %s187
          %s190 = sshll.u32 [#allocation7], 4
          %s191 = int_to_ptr.vmem [resolvable:$true] %s190
          %193 = dma.hbm_to_vmem [thread:$0]  %s2, 64, %s191, [#allocation6]
        $region20: #{tpu_custom_call.1} parent=11 // pred_fallthru
          _
        // Predicated region
        $region21: #{tpu_custom_call.1} parent=11 // pred_check
          %p194 = pneg %p108
        $region22: #{tpu_custom_call.1} parent=11 // pred_check_branch
          %196 = sbr.rel (%p194) target = $region24
        $region23: #{tpu_custom_call.1} parent=11 // pred_region
          %s198 = ssub.s32 4096, 4096
          %199 = vsyncadd [#allocation9], %s198
          %s200 = sshll.u32 [#allocation8], 4
          %s201 = int_to_ptr.vmem [resolvable:$true] %s200
          %206 = dma.hbm_to_vmem [thread:$0]  %s3, 4096, %s201, [#allocation9], 64, 64, 4
        $region24: #{tpu_custom_call.1} parent=11 // pred_fallthru
          _
        // Predicated region
        $region25: #{tpu_custom_call.1} parent=11 // pred_check
          %p207 = pneg %p129
        $region26: #{tpu_custom_call.1} parent=11 // pred_check_branch
          %209 = sbr.rel (%p207) target = $region28
        $region27: #{tpu_custom_call.1} parent=11 // pred_region
          _
        $region28: #{tpu_custom_call.1} parent=11 // pred_fallthru
          _
      $region12: #{tpu_custom_call.1} parent=5 // pred_fallthru
        _
      %p210 = scmp.lt.s32.totalorder %s19, 2
      // Predicated region
      $region29: #{tpu_custom_call.1} parent=5 // pred_check
        %p211 = pneg %p210
      $region30: #{tpu_custom_call.1} parent=5 // pred_check_branch
        %213 = sbr.rel (%p211) target = $region32
      $region31: #{tpu_custom_call.1} parent=5 // pred_region
        // Predicated region
        $region33: #{tpu_custom_call.1} parent=31 // pred_check
          %p214 = pneg %p39
        $region34: #{tpu_custom_call.1} parent=31 // pred_check_branch
          %216 = sbr.rel (%p214) target = $region36
        $region35: #{tpu_custom_call.1} parent=31 // pred_region
          %s217 = sand.u32 %s29, 1
          %s218 = scalar_lea.sflag [#allocation3], %s217
          %s219 = sand.u32 %s29, 1
          %s220 = smul.addr %s219, 128
          %s221 = scalar_lea.vmem [#allocation2], %s220
          %s222 = smul.u32 16, %s19
          %s224 = ssub.s32 2048, 2048
          %225 = vsyncadd %s218, %s224
          %s226 = smul.addr %s222, 128
          %s227 = scalar_lea.hbm %s0, %s226
          %s228 = sshll.u32 %s221, 4
          %s229 = int_to_ptr.vmem [resolvable:$true] %s228
          %234 = dma.hbm_to_vmem [thread:$0]  %s227, 2048, %s229, %s218, 128, 128, 8
        $region36: #{tpu_custom_call.1} parent=31 // pred_fallthru
          _
      $region32: #{tpu_custom_call.1} parent=5 // pred_fallthru
        _
      %p235 = scmp.le.s32.totalorder 1, %s19
      %p236 = scmp.lt.s32.totalorder %s19, 3
      %p237 = pnand %p235, %p236
      %p238 = pneg %p237
      // Predicated region
      $region37: #{tpu_custom_call.1} parent=5 // pred_check
        _
      $region38: #{tpu_custom_call.1} parent=5 // pred_check_branch
        %240 = sbr.rel (%p237) target = $region40
      $region39: #{tpu_custom_call.1} parent=5 // pred_region
        %s241 = ssub.s32 %s19, 1
        %s242 = sand.u32 %s32, 1
        %s243 = scalar_lea.sflag [#allocation3], %s242
        %s244 = sand.u32 %s32, 1
        %s245 = smul.addr %s244, 128
        %s246 = scalar_lea.vmem [#allocation2], %s245
        // Predicated region
        $region41: #{tpu_custom_call.1} parent=39 // pred_check
          %p247 = pneg %p45
        $region42: #{tpu_custom_call.1} parent=39 // pred_check_branch
          %249 = sbr.rel (%p247) target = $region44
        $region43: #{tpu_custom_call.1} parent=39 // pred_region
          %250 = dma.done %s243, 2048
        $region44: #{tpu_custom_call.1} parent=39 // pred_fallthru
          _
        // Predicated region
        $region45: #{tpu_custom_call.1} parent=39 // pred_check
          %p251 = pneg %p66
        $region46: #{tpu_custom_call.1} parent=39 // pred_check_branch
          %253 = sbr.rel (%p251) target = $region48
        $region47: #{tpu_custom_call.1} parent=39 // pred_region
          %254 = dma.done [#allocation6], 4096
        $region48: #{tpu_custom_call.1} parent=39 // pred_fallthru
          _
        // Predicated region
        $region49: #{tpu_custom_call.1} parent=39 // pred_check
          %p255 = pneg %p87
        $region50: #{tpu_custom_call.1} parent=39 // pred_check_branch
          %257 = sbr.rel (%p255) target = $region52
        $region51: #{tpu_custom_call.1} parent=39 // pred_region
          %258 = dma.done [#allocation6], 64
        $region52: #{tpu_custom_call.1} parent=39 // pred_fallthru
          _
        // Predicated region
        $region53: #{tpu_custom_call.1} parent=39 // pred_check
          %p259 = pneg %p108
        $region54: #{tpu_custom_call.1} parent=39 // pred_check_branch
          %261 = sbr.rel (%p259) target = $region56
        $region55: #{tpu_custom_call.1} parent=39 // pred_region
          %262 = dma.done [#allocation9], 4096
        $region56: #{tpu_custom_call.1} parent=39 // pred_fallthru
          _
        %s263 = sand.u32 %s32, 1
        %s264 = scalar_lea.sflag [#allocation3], %s263
        %s265 = sand.u32 %s32, 1
        %s266 = smul.addr %s265, 128
        %s267 = scalar_lea.vmem [#allocation2], %s266
        %p268 = pneg %p45
        %p269 = pneg %p42
        %p270 = pneg %p66
        %p271 = pneg %p63
        %p272 = pneg %p87
        %p273 = pneg %p84
        %p274 = pneg %p108
        %p275 = pneg %p105
        %p276 = pneg %p129
        %p277 = pneg %p126
        %p278 = pneg %p155
        %p279 = pneg %p152
        %s280 = sand.u32 %s142, 1
        %s281 = scalar_lea.sflag [#allocation4], %s280
        %s282 = sand.u32 %s142, 1
        %s283 = smul.addr %s282, 128
        %s284 = scalar_lea.vmem [#allocation10], %s283
        %s285 = smul.u32 16, %s24
        %s286 = smul.u32 16, %s24
        %v288 = vld [vmem:[%s246] sm:$0xff]
        %v289 = vld [vmem:[%s246 + $0x8] sm:$0xff]
        %v290 = vld [vmem:[%s246 + $0x10] sm:$0xff]
        %v291 = vld [vmem:[%s246 + $0x18] sm:$0xff]
        %v292 = vld [vmem:[%s246 + $0x20] sm:$0xff]
        %v293 = vld [vmem:[%s246 + $0x28] sm:$0xff]
        %v294 = vld [vmem:[%s246 + $0x30] sm:$0xff]
        %v295 = vld [vmem:[%s246 + $0x38] sm:$0xff]
        %v296 = vld [vmem:[%s246 + $0x40] sm:$0xff]
        %v297 = vld [vmem:[%s246 + $0x48] sm:$0xff]
        %v298 = vld [vmem:[%s246 + $0x50] sm:$0xff]
        %v299 = vld [vmem:[%s246 + $0x58] sm:$0xff]
        %v300 = vld [vmem:[%s246 + $0x60] sm:$0xff]
        %v301 = vld [vmem:[%s246 + $0x68] sm:$0xff]
        %v302 = vld [vmem:[%s246 + $0x70] sm:$0xff]
        %v303 = vld [vmem:[%s246 + $0x78] sm:$0xff]
        %v304 = vpack.c.bf16 %v289, %v288
        %v305 = vpack.c.bf16 %v291, %v290
        %v306 = vpack.c.bf16 %v293, %v292
        %v307 = vpack.c.bf16 %v295, %v294
        %v308 = vpack.c.bf16 %v297, %v296
        %v309 = vpack.c.bf16 %v299, %v298
        %v310 = vpack.c.bf16 %v301, %v300
        %v311 = vpack.c.bf16 %v303, %v302
        %v312 = vld [vmem:[#allocation5] sm:$0xff]
        %v313 = vld [vmem:[#allocation5 + $0x8] sm:$0xff]
        %v314 = vld [vmem:[#allocation5 + $0x10] sm:$0xff]
        %v315 = vld [vmem:[#allocation5 + $0x18] sm:$0xff]
        %v316 = vld [vmem:[#allocation5 + $0x20] sm:$0xff]
        %v317 = vld [vmem:[#allocation5 + $0x28] sm:$0xff]
        %v318 = vld [vmem:[#allocation5 + $0x30] sm:$0xff]
        %v319 = vld [vmem:[#allocation5 + $0x38] sm:$0xff]
        %v320 = vld [vmem:[#allocation5 + $0x40] sm:$0xff]
        %v321 = vld [vmem:[#allocation5 + $0x48] sm:$0xff]
        %v322 = vld [vmem:[#allocation5 + $0x50] sm:$0xff]
        %v323 = vld [vmem:[#allocation5 + $0x58] sm:$0xff]
        %v324 = vld [vmem:[#allocation5 + $0x60] sm:$0xff]
        %v325 = vld [vmem:[#allocation5 + $0x68] sm:$0xff]
        %v326 = vld [vmem:[#allocation5 + $0x70] sm:$0xff]
        %v327 = vld [vmem:[#allocation5 + $0x78] sm:$0xff]
        %v328 = vld [vmem:[#allocation5 + $0x80] sm:$0xff]
        %v329 = vld [vmem:[#allocation5 + $0x88] sm:$0xff]
        %v330 = vld [vmem:[#allocation5 + $0x90] sm:$0xff]
        %v331 = vld [vmem:[#allocation5 + $0x98] sm:$0xff]
        %v332 = vld [vmem:[#allocation5 + $0xa0] sm:$0xff]
        %v333 = vld [vmem:[#allocation5 + $0xa8] sm:$0xff]
        %v334 = vld [vmem:[#allocation5 + $0xb0] sm:$0xff]
        %v335 = vld [vmem:[#allocation5 + $0xb8] sm:$0xff]
        %v336 = vld [vmem:[#allocation5 + $0xc0] sm:$0xff]
        %v337 = vld [vmem:[#allocation5 + $0xc8] sm:$0xff]
        %v338 = vld [vmem:[#allocation5 + $0xd0] sm:$0xff]
        %v339 = vld [vmem:[#allocation5 + $0xd8] sm:$0xff]
        %v340 = vld [vmem:[#allocation5 + $0xe0] sm:$0xff]
        %v341 = vld [vmem:[#allocation5 + $0xe8] sm:$0xff]
        %v342 = vld [vmem:[#allocation5 + $0xf0] sm:$0xff]
        %v343 = vld [vmem:[#allocation5 + $0xf8] sm:$0xff]
        %v344 = vld [vmem:[#allocation7] sm:$0xf]
        %v346 = vlaneseq
        %v347 = vshrl.u32 %v346, 7
        %v348 = vsub.s32 0, %v347
        %v349 = vrot.slane %v344, %v348
        %v350 = vlaneseq
        %v351 = vshrl.u32 %v350, 7
        %v352 = vsub.s32 1, %v351
        %v353 = vrot.slane %v344, %v352
        %v354 = vlaneseq
        %v355 = vshrl.u32 %v354, 7
        %v356 = vsub.s32 2, %v355
        %v357 = vrot.slane %v344, %v356
        %v358 = vlaneseq
        %v359 = vshrl.u32 %v358, 7
        %v360 = vsub.s32 3, %v359
        %v361 = vrot.slane %v344, %v360
        %v398 = vunpack.c.l.b16 %v312
        %v399 = vunpack.c.h.b16 %v312
        %v400 = vunpack.c.l.b16 %v313
        %v401 = vunpack.c.h.b16 %v313
        %v402 = vunpack.c.l.b16 %v314
        %v403 = vunpack.c.h.b16 %v314
        %v404 = vunpack.c.l.b16 %v315
        %v405 = vunpack.c.h.b16 %v315
        %v406 = vunpack.c.l.b16 %v316
        %v407 = vunpack.c.h.b16 %v316
        %v408 = vunpack.c.l.b16 %v317
        %v409 = vunpack.c.h.b16 %v317
        %v410 = vunpack.c.l.b16 %v318
        %v411 = vunpack.c.h.b16 %v318
        %v412 = vunpack.c.l.b16 %v319
        %v413 = vunpack.c.h.b16 %v319
        %v414 = vunpack.c.l.b16 %v320
        %v415 = vunpack.c.h.b16 %v320
        %v416 = vunpack.c.l.b16 %v321
        %v417 = vunpack.c.h.b16 %v321
        %v418 = vunpack.c.l.b16 %v322
        %v419 = vunpack.c.h.b16 %v322
        %v420 = vunpack.c.l.b16 %v323
        %v421 = vunpack.c.h.b16 %v323
        %v422 = vunpack.c.l.b16 %v324
        %v423 = vunpack.c.h.b16 %v324
        %v424 = vunpack.c.l.b16 %v325
        %v425 = vunpack.c.h.b16 %v325
        %v426 = vunpack.c.l.b16 %v326
        %v427 = vunpack.c.h.b16 %v326
        %v428 = vunpack.c.l.b16 %v327
        %v429 = vunpack.c.h.b16 %v327
        %v430 = vunpack.c.l.b16 %v328
        %v431 = vunpack.c.h.b16 %v328
        %v432 = vunpack.c.l.b16 %v329
        %v433 = vunpack.c.h.b16 %v329
        %v434 = vunpack.c.l.b16 %v330
        %v435 = vunpack.c.h.b16 %v330
        %v436 = vunpack.c.l.b16 %v331
        %v437 = vunpack.c.h.b16 %v331
        %v438 = vunpack.c.l.b16 %v332
        %v439 = vunpack.c.h.b16 %v332
        %v440 = vunpack.c.l.b16 %v333
        %v441 = vunpack.c.h.b16 %v333
        %v442 = vunpack.c.l.b16 %v334
        %v443 = vunpack.c.h.b16 %v334
        %v444 = vunpack.c.l.b16 %v335
        %v445 = vunpack.c.h.b16 %v335
        %v446 = vunpack.c.l.b16 %v336
        %v447 = vunpack.c.h.b16 %v336
        %v448 = vunpack.c.l.b16 %v337
        %v449 = vunpack.c.h.b16 %v337
        %v450 = vunpack.c.l.b16 %v338
        %v451 = vunpack.c.h.b16 %v338
        %v452 = vunpack.c.l.b16 %v339
        %v453 = vunpack.c.h.b16 %v339
        %v454 = vunpack.c.l.b16 %v340
        %v455 = vunpack.c.h.b16 %v340
        %v456 = vunpack.c.l.b16 %v341
        %v457 = vunpack.c.h.b16 %v341
        %v458 = vunpack.c.l.b16 %v342
        %v459 = vunpack.c.h.b16 %v342
        %v460 = vunpack.c.l.b16 %v343
        %v461 = vunpack.c.h.b16 %v343
        %v462 = vpack.c.b16 %v402, %v398
        %v463 = vpack.c.b16 %v403, %v399
        %v464 = vpack.c.b16 %v404, %v400
        %v465 = vpack.c.b16 %v405, %v401
        %v466 = vpack.c.b16 %v410, %v406
        %v467 = vpack.c.b16 %v411, %v407
        %v468 = vpack.c.b16 %v412, %v408
        %v469 = vpack.c.b16 %v413, %v409
        %v470 = vpack.c.b16 %v418, %v414
        %v471 = vpack.c.b16 %v419, %v415
        %v472 = vpack.c.b16 %v420, %v416
        %v473 = vpack.c.b16 %v421, %v417
        %v474 = vpack.c.b16 %v426, %v422
        %v475 = vpack.c.b16 %v427, %v423
        %v476 = vpack.c.b16 %v428, %v424
        %v477 = vpack.c.b16 %v429, %v425
        %v478 = vpack.c.b16 %v434, %v430
        %v479 = vpack.c.b16 %v435, %v431
        %v480 = vpack.c.b16 %v436, %v432
        %v481 = vpack.c.b16 %v437, %v433
        %v482 = vpack.c.b16 %v442, %v438
        %v483 = vpack.c.b16 %v443, %v439
        %v484 = vpack.c.b16 %v444, %v440
        %v485 = vpack.c.b16 %v445, %v441
        %v486 = vpack.c.b16 %v450, %v446
        %v487 = vpack.c.b16 %v451, %v447
        %v488 = vpack.c.b16 %v452, %v448
        %v489 = vpack.c.b16 %v453, %v449
        %v490 = vpack.c.b16 %v458, %v454
        %v491 = vpack.c.b16 %v459, %v455
        %v492 = vpack.c.b16 %v460, %v456
        %v493 = vpack.c.b16 %v461, %v457
        %526 = vmatprep.subr.bf16.mxu0 %v491
        %527 = vmatpush1.bf16.msra.mxu0 %v490
        %528 = vmatprep.subr.bf16.mxu0 %v487
        %529 = vmatpush1.bf16.msra.mxu0 %v486
        %530 = vmatprep.subr.bf16.mxu0 %v483
        %531 = vmatpush1.bf16.msra.mxu0 %v482
        %532 = vmatprep.subr.bf16.mxu0 %v479
        %533 = vmatpush1.bf16.msra.mxu0 %v478
        %534 = vmatprep.subr.bf16.mxu0 %v475
        %535 = vmatpush1.bf16.msra.mxu0 %v474
        %536 = vmatprep.subr.bf16.mxu0 %v471
        %537 = vmatpush1.bf16.msra.mxu0 %v470
        %538 = vmatprep.subr.bf16.mxu0 %v467
        %539 = vmatpush1.bf16.msra.mxu0 %v466
        %540 = vmatprep.subr.bf16.mxu0 %v463
        %541 = vmatpush1.bf16.msra.mxu0 %v462
        %542 = vmatprep.subr.bf16.mxu0 0
        %543 = vmatpush2.bf16.msra.mxu0 0
        %544 = vmatprep.subr.bf16.mxu0 0
        %545 = vmatpush2.bf16.msra.mxu0 0
        %546 = vmatprep.subr.bf16.mxu0 0
        %547 = vmatpush2.bf16.msra.mxu0 0
        %548 = vmatprep.subr.bf16.mxu0 0
        %549 = vmatpush2.bf16.msra.mxu0 0
        %550 = vmatprep.subr.bf16.mxu0 0
        %551 = vmatpush2.bf16.msra.mxu0 0
        %552 = vmatprep.subr.bf16.mxu0 0
        %553 = vmatpush2.bf16.msra.mxu0 0
        %554 = vmatprep.subr.bf16.mxu0 0
        %555 = vmatpush2.bf16.msra.mxu0 0
        %556 = vmatprep.subr.bf16.mxu0 0
        %557 = vmatpush2.bf16.msra.mxu0 0
        %558 = vmatprep.mubr.bf16.mxu0 0
        %559 = vmatmul.mubr.bf16.gmra.mxu0 %v304
        %v560 = vpop.f32.mrf.mxu0
        %v561 = vadd.f32 %v349, %v560
        %v562 = vpop.f32.mrf.mxu0
        %v563 = vadd.f32 %v353, %v562
        %v564 = vpop.f32.mrf.mxu0
        %v565 = vadd.f32 %v349, %v564
        %v566 = vpop.f32.mrf.mxu0
        %v567 = vadd.f32 %v353, %v566
        %568 = vmatprep.mubr.bf16.mxu0 0
        %569 = vmatmul.mubr.bf16.gmra.mxu0 %v305
        %v570 = vpop.f32.mrf.mxu0
        %v571 = vadd.f32 %v349, %v570
        %v572 = vpop.f32.mrf.mxu0
        %v573 = vadd.f32 %v353, %v572
        %v574 = vpop.f32.mrf.mxu0
        %v575 = vadd.f32 %v349, %v574
        %v576 = vpop.f32.mrf.mxu0
        %v577 = vadd.f32 %v353, %v576
        %578 = vmatprep.mubr.bf16.mxu0 0
        %579 = vmatmul.mubr.bf16.gmra.mxu0 %v306
        %v580 = vpop.f32.mrf.mxu0
        %v581 = vadd.f32 %v349, %v580
        %v582 = vpop.f32.mrf.mxu0
        %v583 = vadd.f32 %v353, %v582
        %v584 = vpop.f32.mrf.mxu0
        %v585 = vadd.f32 %v349, %v584
        %v586 = vpop.f32.mrf.mxu0
        %v587 = vadd.f32 %v353, %v586
        %588 = vmatprep.mubr.bf16.mxu0 0
        %589 = vmatmul.mubr.bf16.gmra.mxu0 %v307
        %v590 = vpop.f32.mrf.mxu0
        %v591 = vadd.f32 %v349, %v590
        %v592 = vpop.f32.mrf.mxu0
        %v593 = vadd.f32 %v353, %v592
        %v594 = vpop.f32.mrf.mxu0
        %v595 = vadd.f32 %v349, %v594
        %v596 = vpop.f32.mrf.mxu0
        %v597 = vadd.f32 %v353, %v596
        %598 = vmatprep.mubr.bf16.mxu0 0
        %599 = vmatmul.mubr.bf16.gmra.mxu0 %v308
        %v600 = vpop.f32.mrf.mxu0
        %v601 = vadd.f32 %v349, %v600
        %v602 = vpop.f32.mrf.mxu0
        %v603 = vadd.f32 %v353, %v602
        %v604 = vpop.f32.mrf.mxu0
        %v605 = vadd.f32 %v349, %v604
        %v606 = vpop.f32.mrf.mxu0
        %v607 = vadd.f32 %v353, %v606
        %608 = vmatprep.mubr.bf16.mxu0 0
        %609 = vmatmul.mubr.bf16.gmra.mxu0 %v309
        %v610 = vpop.f32.mrf.mxu0
        %v611 = vadd.f32 %v349, %v610
        %v612 = vpop.f32.mrf.mxu0
        %v613 = vadd.f32 %v353, %v612
        %v614 = vpop.f32.mrf.mxu0
        %v615 = vadd.f32 %v349, %v614
        %v616 = vpop.f32.mrf.mxu0
        %v617 = vadd.f32 %v353, %v616
        %618 = vmatprep.mubr.bf16.mxu0 0
        %619 = vmatmul.mubr.bf16.gmra.mxu0 %v310
        %v620 = vpop.f32.mrf.mxu0
        %v621 = vadd.f32 %v349, %v620
        %v622 = vpop.f32.mrf.mxu0
        %v623 = vadd.f32 %v353, %v622
        %v624 = vpop.f32.mrf.mxu0
        %v625 = vadd.f32 %v349, %v624
        %v626 = vpop.f32.mrf.mxu0
        %v627 = vadd.f32 %v353, %v626
        %628 = vmatprep.mubr.bf16.mxu0 0
        %629 = vmatmul.mubr.bf16.gmra.mxu0 %v311
        %v630 = vpop.f32.mrf.mxu0
        %v631 = vadd.f32 %v349, %v630
        %v632 = vpop.f32.mrf.mxu0
        %v633 = vadd.f32 %v353, %v632
        %v634 = vpop.f32.mrf.mxu0
        %v635 = vadd.f32 %v349, %v634
        %v636 = vpop.f32.mrf.mxu0
        %v637 = vadd.f32 %v353, %v636
        %638 = vdwg.mxu0
        %639 = vmatprep.subr.bf16.mxu0 %v493
        %640 = vmatpush1.bf16.msra.mxu0 %v492
        %641 = vmatprep.subr.bf16.mxu0 %v489
        %642 = vmatpush1.bf16.msra.mxu0 %v488
        %643 = vmatprep.subr.bf16.mxu0 %v485
        %644 = vmatpush1.bf16.msra.mxu0 %v484
        %645 = vmatprep.subr.bf16.mxu0 %v481
        %646 = vmatpush1.bf16.msra.mxu0 %v480
        %647 = vmatprep.subr.bf16.mxu0 %v477
        %648 = vmatpush1.bf16.msra.mxu0 %v476
        %649 = vmatprep.subr.bf16.mxu0 %v473
        %650 = vmatpush1.bf16.msra.mxu0 %v472
        %651 = vmatprep.subr.bf16.mxu0 %v469
        %652 = vmatpush1.bf16.msra.mxu0 %v468
        %653 = vmatprep.subr.bf16.mxu0 %v465
        %654 = vmatpush1.bf16.msra.mxu0 %v464
        %655 = vmatprep.subr.bf16.mxu0 0
        %656 = vmatpush2.bf16.msra.mxu0 0
        %657 = vmatprep.subr.bf16.mxu0 0
        %658 = vmatpush2.bf16.msra.mxu0 0
        %659 = vmatprep.subr.bf16.mxu0 0
        %660 = vmatpush2.bf16.msra.mxu0 0
        %661 = vmatprep.subr.bf16.mxu0 0
        %662 = vmatpush2.bf16.msra.mxu0 0
        %663 = vmatprep.subr.bf16.mxu0 0
        %664 = vmatpush2.bf16.msra.mxu0 0
        %665 = vmatprep.subr.bf16.mxu0 0
        %666 = vmatpush2.bf16.msra.mxu0 0
        %667 = vmatprep.subr.bf16.mxu0 0
        %668 = vmatpush2.bf16.msra.mxu0 0
        %669 = vmatprep.subr.bf16.mxu0 0
        %670 = vmatpush2.bf16.msra.mxu0 0
        %671 = vmatprep.mubr.bf16.mxu0 0
        %672 = vmatmul.mubr.bf16.gmra.mxu0 %v304
        %v673 = vpop.f32.mrf.mxu0
        %v674 = vadd.f32 %v357, %v673
        %v675 = vpop.f32.mrf.mxu0
        %v676 = vadd.f32 %v361, %v675
        %v677 = vpop.f32.mrf.mxu0
        %v678 = vadd.f32 %v357, %v677
        %v679 = vpop.f32.mrf.mxu0
        %v680 = vadd.f32 %v361, %v679
        %681 = vmatprep.mubr.bf16.mxu0 0
        %682 = vmatmul.mubr.bf16.gmra.mxu0 %v305
        %v683 = vpop.f32.mrf.mxu0
        %v684 = vadd.f32 %v357, %v683
        %v685 = vpop.f32.mrf.mxu0
        %v686 = vadd.f32 %v361, %v685
        %v687 = vpop.f32.mrf.mxu0
        %v688 = vadd.f32 %v357, %v687
        %v689 = vpop.f32.mrf.mxu0
        %v690 = vadd.f32 %v361, %v689
        %691 = vmatprep.mubr.bf16.mxu0 0
        %692 = vmatmul.mubr.bf16.gmra.mxu0 %v306
        %v693 = vpop.f32.mrf.mxu0
        %v694 = vadd.f32 %v357, %v693
        %v695 = vpop.f32.mrf.mxu0
        %v696 = vadd.f32 %v361, %v695
        %v697 = vpop.f32.mrf.mxu0
        %v698 = vadd.f32 %v357, %v697
        %v699 = vpop.f32.mrf.mxu0
        %v700 = vadd.f32 %v361, %v699
        %701 = vmatprep.mubr.bf16.mxu0 0
        %702 = vmatmul.mubr.bf16.gmra.mxu0 %v307
        %v703 = vpop.f32.mrf.mxu0
        %v704 = vadd.f32 %v357, %v703
        %v705 = vpop.f32.mrf.mxu0
        %v706 = vadd.f32 %v361, %v705
        %v707 = vpop.f32.mrf.mxu0
        %v708 = vadd.f32 %v357, %v707
        %v709 = vpop.f32.mrf.mxu0
        %v710 = vadd.f32 %v361, %v709
        %711 = vmatprep.mubr.bf16.mxu0 0
        %712 = vmatmul.mubr.bf16.gmra.mxu0 %v308
        %v713 = vpop.f32.mrf.mxu0
        %v714 = vadd.f32 %v357, %v713
        %v715 = vpop.f32.mrf.mxu0
        %v716 = vadd.f32 %v361, %v715
        %v717 = vpop.f32.mrf.mxu0
        %v718 = vadd.f32 %v357, %v717
        %v719 = vpop.f32.mrf.mxu0
        %v720 = vadd.f32 %v361, %v719
        %721 = vmatprep.mubr.bf16.mxu0 0
        %722 = vmatmul.mubr.bf16.gmra.mxu0 %v309
        %v723 = vpop.f32.mrf.mxu0
        %v724 = vadd.f32 %v357, %v723
        %v725 = vpop.f32.mrf.mxu0
        %v726 = vadd.f32 %v361, %v725
        %v727 = vpop.f32.mrf.mxu0
        %v728 = vadd.f32 %v357, %v727
        %v729 = vpop.f32.mrf.mxu0
        %v730 = vadd.f32 %v361, %v729
        %731 = vmatprep.mubr.bf16.mxu0 0
        %732 = vmatmul.mubr.bf16.gmra.mxu0 %v310
        %v733 = vpop.f32.mrf.mxu0
        %v734 = vadd.f32 %v357, %v733
        %v735 = vpop.f32.mrf.mxu0
        %v736 = vadd.f32 %v361, %v735
        %v737 = vpop.f32.mrf.mxu0
        %v738 = vadd.f32 %v357, %v737
        %v739 = vpop.f32.mrf.mxu0
        %v740 = vadd.f32 %v361, %v739
        %741 = vmatprep.mubr.bf16.mxu0 0
        %742 = vmatmul.mubr.bf16.gmra.mxu0 %v311
        %v743 = vpop.f32.mrf.mxu0
        %v744 = vadd.f32 %v357, %v743
        %v745 = vpop.f32.mrf.mxu0
        %v746 = vadd.f32 %v361, %v745
        %v747 = vpop.f32.mrf.mxu0
        %v748 = vadd.f32 %v357, %v747
        %v749 = vpop.f32.mrf.mxu0
        %v750 = vadd.f32 %v361, %v749
        %751 = vdwg.mxu0
        %v752 = vmul.f32 %v561, 0.5
        %v753 = vmul.f32 %v563, 0.5
        %v754 = vmul.f32 %v674, 0.5
        %v755 = vmul.f32 %v676, 0.5
        %v756 = vmul.f32 %v565, 0.5
        %v757 = vmul.f32 %v567, 0.5
        %v758 = vmul.f32 %v678, 0.5
        %v759 = vmul.f32 %v680, 0.5
        %v760 = vmul.f32 %v571, 0.5
        %v761 = vmul.f32 %v573, 0.5
        %v762 = vmul.f32 %v684, 0.5
        %v763 = vmul.f32 %v686, 0.5
        %v764 = vmul.f32 %v575, 0.5
        %v765 = vmul.f32 %v577, 0.5
        %v766 = vmul.f32 %v688, 0.5
        %v767 = vmul.f32 %v690, 0.5
        %v768 = vmul.f32 %v581, 0.5
        %v769 = vmul.f32 %v583, 0.5
        %v770 = vmul.f32 %v694, 0.5
        %v771 = vmul.f32 %v696, 0.5
        %v772 = vmul.f32 %v585, 0.5
        %v773 = vmul.f32 %v587, 0.5
        %v774 = vmul.f32 %v698, 0.5
        %v775 = vmul.f32 %v700, 0.5
        %v776 = vmul.f32 %v591, 0.5
        %v777 = vmul.f32 %v593, 0.5
        %v778 = vmul.f32 %v704, 0.5
        %v779 = vmul.f32 %v706, 0.5
        %v780 = vmul.f32 %v595, 0.5
        %v781 = vmul.f32 %v597, 0.5
        %v782 = vmul.f32 %v708, 0.5
        %v783 = vmul.f32 %v710, 0.5
        %v784 = vmul.f32 %v601, 0.5
        %v785 = vmul.f32 %v603, 0.5
        %v786 = vmul.f32 %v714, 0.5
        %v787 = vmul.f32 %v716, 0.5
        %v788 = vmul.f32 %v605, 0.5
        %v789 = vmul.f32 %v607, 0.5
        %v790 = vmul.f32 %v718, 0.5
        %v791 = vmul.f32 %v720, 0.5
        %v792 = vmul.f32 %v611, 0.5
        %v793 = vmul.f32 %v613, 0.5
        %v794 = vmul.f32 %v724, 0.5
        %v795 = vmul.f32 %v726, 0.5
        %v796 = vmul.f32 %v615, 0.5
        %v797 = vmul.f32 %v617, 0.5
        %v798 = vmul.f32 %v728, 0.5
        %v799 = vmul.f32 %v730, 0.5
        %v800 = vmul.f32 %v621, 0.5
        %v801 = vmul.f32 %v623, 0.5
        %v802 = vmul.f32 %v734, 0.5
        %v803 = vmul.f32 %v736, 0.5
        %v804 = vmul.f32 %v625, 0.5
        %v805 = vmul.f32 %v627, 0.5
        %v806 = vmul.f32 %v738, 0.5
        %v807 = vmul.f32 %v740, 0.5
        %v808 = vmul.f32 %v631, 0.5
        %v809 = vmul.f32 %v633, 0.5
        %v810 = vmul.f32 %v744, 0.5
        %v811 = vmul.f32 %v746, 0.5
        %v812 = vmul.f32 %v635, 0.5
        %v813 = vmul.f32 %v637, 0.5
        %v814 = vmul.f32 %v748, 0.5
        %v815 = vmul.f32 %v750, 0.5
        %v816 = vmul.f32 %v561, 0.70710677
        %v817 = vmul.f32 %v563, 0.70710677
        %v818 = vmul.f32 %v674, 0.70710677
        %v819 = vmul.f32 %v676, 0.70710677
        %v820 = vmul.f32 %v565, 0.70710677
        %v821 = vmul.f32 %v567, 0.70710677
        %v822 = vmul.f32 %v678, 0.70710677
        %v823 = vmul.f32 %v680, 0.70710677
        %v824 = vmul.f32 %v571, 0.70710677
        %v825 = vmul.f32 %v573, 0.70710677
        %v826 = vmul.f32 %v684, 0.70710677
        %v827 = vmul.f32 %v686, 0.70710677
        %v828 = vmul.f32 %v575, 0.70710677
        %v829 = vmul.f32 %v577, 0.70710677
        %v830 = vmul.f32 %v688, 0.70710677
        %v831 = vmul.f32 %v690, 0.70710677
        %v832 = vmul.f32 %v581, 0.70710677
        %v833 = vmul.f32 %v583, 0.70710677
        %v834 = vmul.f32 %v694, 0.70710677
        %v835 = vmul.f32 %v696, 0.70710677
        %v836 = vmul.f32 %v585, 0.70710677
        %v837 = vmul.f32 %v587, 0.70710677
        %v838 = vmul.f32 %v698, 0.70710677
        %v839 = vmul.f32 %v700, 0.70710677
        %v840 = vmul.f32 %v591, 0.70710677
        %v841 = vmul.f32 %v593, 0.70710677
        %v842 = vmul.f32 %v704, 0.70710677
        %v843 = vmul.f32 %v706, 0.70710677
        %v844 = vmul.f32 %v595, 0.70710677
        %v845 = vmul.f32 %v597, 0.70710677
        %v846 = vmul.f32 %v708, 0.70710677
        %v847 = vmul.f32 %v710, 0.70710677
        %v848 = vmul.f32 %v601, 0.70710677
        %v849 = vmul.f32 %v603, 0.70710677
        %v850 = vmul.f32 %v714, 0.70710677
        %v851 = vmul.f32 %v716, 0.70710677
        %v852 = vmul.f32 %v605, 0.70710677
        %v853 = vmul.f32 %v607, 0.70710677
        %v854 = vmul.f32 %v718, 0.70710677
        %v855 = vmul.f32 %v720, 0.70710677
        %v856 = vmul.f32 %v611, 0.70710677
        %v857 = vmul.f32 %v613, 0.70710677
        %v858 = vmul.f32 %v724, 0.70710677
        %v859 = vmul.f32 %v726, 0.70710677
        %v860 = vmul.f32 %v615, 0.70710677
        %v861 = vmul.f32 %v617, 0.70710677
        %v862 = vmul.f32 %v728, 0.70710677
        %v863 = vmul.f32 %v730, 0.70710677
        %v864 = vmul.f32 %v621, 0.70710677
        %v865 = vmul.f32 %v623, 0.70710677
        %v866 = vmul.f32 %v734, 0.70710677
        %v867 = vmul.f32 %v736, 0.70710677
        %v868 = vmul.f32 %v625, 0.70710677
        %v869 = vmul.f32 %v627, 0.70710677
        %v870 = vmul.f32 %v738, 0.70710677
        %v871 = vmul.f32 %v740, 0.70710677
        %v872 = vmul.f32 %v631, 0.70710677
        %v873 = vmul.f32 %v633, 0.70710677
        %v874 = vmul.f32 %v744, 0.70710677
        %v875 = vmul.f32 %v746, 0.70710677
        %v876 = vmul.f32 %v635, 0.70710677
        %v877 = vmul.f32 %v637, 0.70710677
        %v878 = vmul.f32 %v748, 0.70710677
        %v879 = vmul.f32 %v750, 0.70710677
        %v880 = vmax.f32 %v816, -4.0
        %v881 = vmax.f32 %v817, -4.0
        %v882 = vmax.f32 %v818, -4.0
        %v883 = vmax.f32 %v819, -4.0
        %v884 = vmax.f32 %v820, -4.0
        %v885 = vmax.f32 %v821, -4.0
        %v886 = vmax.f32 %v822, -4.0
        %v887 = vmax.f32 %v823, -4.0
        %v888 = vmax.f32 %v824, -4.0
        %v889 = vmax.f32 %v825, -4.0
        %v890 = vmax.f32 %v826, -4.0
        %v891 = vmax.f32 %v827, -4.0
        %v892 = vmax.f32 %v828, -4.0
        %v893 = vmax.f32 %v829, -4.0
        %v894 = vmax.f32 %v830, -4.0
        %v895 = vmax.f32 %v831, -4.0
        %v896 = vmax.f32 %v832, -4.0
        %v897 = vmax.f32 %v833, -4.0
        %v898 = vmax.f32 %v834, -4.0
        %v899 = vmax.f32 %v835, -4.0
        %v900 = vmax.f32 %v836, -4.0
        %v901 = vmax.f32 %v837, -4.0
        %v902 = vmax.f32 %v838, -4.0
        %v903 = vmax.f32 %v839, -4.0
        %v904 = vmax.f32 %v840, -4.0
        %v905 = vmax.f32 %v841, -4.0
        %v906 = vmax.f32 %v842, -4.0
        %v907 = vmax.f32 %v843, -4.0
        %v908 = vmax.f32 %v844, -4.0
        %v909 = vmax.f32 %v845, -4.0
        %v910 = vmax.f32 %v846, -4.0
        %v911 = vmax.f32 %v847, -4.0
        %v912 = vmax.f32 %v848, -4.0
        %v913 = vmax.f32 %v849, -4.0
        %v914 = vmax.f32 %v850, -4.0
        %v915 = vmax.f32 %v851, -4.0
        %v916 = vmax.f32 %v852, -4.0
        %v917 = vmax.f32 %v853, -4.0
        %v918 = vmax.f32 %v854, -4.0
        %v919 = vmax.f32 %v855, -4.0
        %v920 = vmax.f32 %v856, -4.0
        %v921 = vmax.f32 %v857, -4.0
        %v922 = vmax.f32 %v858, -4.0
        %v923 = vmax.f32 %v859, -4.0
        %v924 = vmax.f32 %v860, -4.0
        %v925 = vmax.f32 %v861, -4.0
        %v926 = vmax.f32 %v862, -4.0
        %v927 = vmax.f32 %v863, -4.0
        %v928 = vmax.f32 %v864, -4.0
        %v929 = vmax.f32 %v865, -4.0
        %v930 = vmax.f32 %v866, -4.0
        %v931 = vmax.f32 %v867, -4.0
        %v932 = vmax.f32 %v868, -4.0
        %v933 = vmax.f32 %v869, -4.0
        %v934 = vmax.f32 %v870, -4.0
        %v935 = vmax.f32 %v871, -4.0
        %v936 = vmax.f32 %v872, -4.0
        %v937 = vmax.f32 %v873, -4.0
        %v938 = vmax.f32 %v874, -4.0
        %v939 = vmax.f32 %v875, -4.0
        %v940 = vmax.f32 %v876, -4.0
        %v941 = vmax.f32 %v877, -4.0
        %v942 = vmax.f32 %v878, -4.0
        %v943 = vmax.f32 %v879, -4.0
        %v944 = vmin.f32 %v880, 4.0
        %v945 = vmin.f32 %v881, 4.0
        %v946 = vmin.f32 %v882, 4.0
        %v947 = vmin.f32 %v883, 4.0
        %v948 = vmin.f32 %v884, 4.0
        %v949 = vmin.f32 %v885, 4.0
        %v950 = vmin.f32 %v886, 4.0
        %v951 = vmin.f32 %v887, 4.0
        %v952 = vmin.f32 %v888, 4.0
        %v953 = vmin.f32 %v889, 4.0
        %v954 = vmin.f32 %v890, 4.0
        %v955 = vmin.f32 %v891, 4.0
        %v956 = vmin.f32 %v892, 4.0
        %v957 = vmin.f32 %v893, 4.0
        %v958 = vmin.f32 %v894, 4.0
        %v959 = vmin.f32 %v895, 4.0
        %v960 = vmin.f32 %v896, 4.0
        %v961 = vmin.f32 %v897, 4.0
        %v962 = vmin.f32 %v898, 4.0
        %v963 = vmin.f32 %v899, 4.0
        %v964 = vmin.f32 %v900, 4.0
        %v965 = vmin.f32 %v901, 4.0
        %v966 = vmin.f32 %v902, 4.0
        %v967 = vmin.f32 %v903, 4.0
        %v968 = vmin.f32 %v904, 4.0
        %v969 = vmin.f32 %v905, 4.0
        %v970 = vmin.f32 %v906, 4.0
        %v971 = vmin.f32 %v907, 4.0
        %v972 = vmin.f32 %v908, 4.0
        %v973 = vmin.f32 %v909, 4.0
        %v974 = vmin.f32 %v910, 4.0
        %v975 = vmin.f32 %v911, 4.0
        %v976 = vmin.f32 %v912, 4.0
        %v977 = vmin.f32 %v913, 4.0
        %v978 = vmin.f32 %v914, 4.0
        %v979 = vmin.f32 %v915, 4.0
        %v980 = vmin.f32 %v916, 4.0
        %v981 = vmin.f32 %v917, 4.0
        %v982 = vmin.f32 %v918, 4.0
        %v983 = vmin.f32 %v919, 4.0
        %v984 = vmin.f32 %v920, 4.0
        %v985 = vmin.f32 %v921, 4.0
        %v986 = vmin.f32 %v922, 4.0
        %v987 = vmin.f32 %v923, 4.0
        %v988 = vmin.f32 %v924, 4.0
        %v989 = vmin.f32 %v925, 4.0
        %v990 = vmin.f32 %v926, 4.0
        %v991 = vmin.f32 %v927, 4.0
        %v992 = vmin.f32 %v928, 4.0
        %v993 = vmin.f32 %v929, 4.0
        %v994 = vmin.f32 %v930, 4.0
        %v995 = vmin.f32 %v931, 4.0
        %v996 = vmin.f32 %v932, 4.0
        %v997 = vmin.f32 %v933, 4.0
        %v998 = vmin.f32 %v934, 4.0
        %v999 = vmin.f32 %v935, 4.0
        %v1000 = vmin.f32 %v936, 4.0
        %v1001 = vmin.f32 %v937, 4.0
        %v1002 = vmin.f32 %v938, 4.0
        %v1003 = vmin.f32 %v939, 4.0
        %v1004 = vmin.f32 %v940, 4.0
        %v1005 = vmin.f32 %v941, 4.0
        %v1006 = vmin.f32 %v942, 4.0
        %v1007 = vmin.f32 %v943, 4.0
        %v1008 = vmul.f32 %v944, %v944
        %v1009 = vmul.f32 %v945, %v945
        %v1010 = vmul.f32 %v946, %v946
        %v1011 = vmul.f32 %v947, %v947
        %v1012 = vmul.f32 %v948, %v948
        %v1013 = vmul.f32 %v949, %v949
        %v1014 = vmul.f32 %v950, %v950
        %v1015 = vmul.f32 %v951, %v951
        %v1016 = vmul.f32 %v952, %v952
        %v1017 = vmul.f32 %v953, %v953
        %v1018 = vmul.f32 %v954, %v954
        %v1019 = vmul.f32 %v955, %v955
        %v1020 = vmul.f32 %v956, %v956
        %v1021 = vmul.f32 %v957, %v957
        %v1022 = vmul.f32 %v958, %v958
        %v1023 = vmul.f32 %v959, %v959
        %v1024 = vmul.f32 %v960, %v960
        %v1025 = vmul.f32 %v961, %v961
        %v1026 = vmul.f32 %v962, %v962
        %v1027 = vmul.f32 %v963, %v963
        %v1028 = vmul.f32 %v964, %v964
        %v1029 = vmul.f32 %v965, %v965
        %v1030 = vmul.f32 %v966, %v966
        %v1031 = vmul.f32 %v967, %v967
        %v1032 = vmul.f32 %v968, %v968
        %v1033 = vmul.f32 %v969, %v969
        %v1034 = vmul.f32 %v970, %v970
        %v1035 = vmul.f32 %v971, %v971
        %v1036 = vmul.f32 %v972, %v972
        %v1037 = vmul.f32 %v973, %v973
        %v1038 = vmul.f32 %v974, %v974
        %v1039 = vmul.f32 %v975, %v975
        %v1040 = vmul.f32 %v976, %v976
        %v1041 = vmul.f32 %v977, %v977
        %v1042 = vmul.f32 %v978, %v978
        %v1043 = vmul.f32 %v979, %v979
        %v1044 = vmul.f32 %v980, %v980
        %v1045 = vmul.f32 %v981, %v981
        %v1046 = vmul.f32 %v982, %v982
        %v1047 = vmul.f32 %v983, %v983
        %v1048 = vmul.f32 %v984, %v984
        %v1049 = vmul.f32 %v985, %v985
        %v1050 = vmul.f32 %v986, %v986
        %v1051 = vmul.f32 %v987, %v987
        %v1052 = vmul.f32 %v988, %v988
        %v1053 = vmul.f32 %v989, %v989
        %v1054 = vmul.f32 %v990, %v990
        %v1055 = vmul.f32 %v991, %v991
        %v1056 = vmul.f32 %v992, %v992
        %v1057 = vmul.f32 %v993, %v993
        %v1058 = vmul.f32 %v994, %v994
        %v1059 = vmul.f32 %v995, %v995
        %v1060 = vmul.f32 %v996, %v996
        %v1061 = vmul.f32 %v997, %v997
        %v1062 = vmul.f32 %v998, %v998
        %v1063 = vmul.f32 %v999, %v999
        %v1064 = vmul.f32 %v1000, %v1000
        %v1065 = vmul.f32 %v1001, %v1001
        %v1066 = vmul.f32 %v1002, %v1002
        %v1067 = vmul.f32 %v1003, %v1003
        %v1068 = vmul.f32 %v1004, %v1004
        %v1069 = vmul.f32 %v1005, %v1005
        %v1070 = vmul.f32 %v1006, %v1006
        %v1071 = vmul.f32 %v1007, %v1007
        %v1072 = vmul.f32 %v1008, 0.00022905065
        %v1073 = vmul.f32 %v1009, 0.00022905065
        %v1074 = vmul.f32 %v1010, 0.00022905065
        %v1075 = vmul.f32 %v1011, 0.00022905065
        %v1076 = vmul.f32 %v1012, 0.00022905065
        %v1077 = vmul.f32 %v1013, 0.00022905065
        %v1078 = vmul.f32 %v1014, 0.00022905065
        %v1079 = vmul.f32 %v1015, 0.00022905065
        %v1080 = vmul.f32 %v1016, 0.00022905065
        %v1081 = vmul.f32 %v1017, 0.00022905065
        %v1082 = vmul.f32 %v1018, 0.00022905065
        %v1083 = vmul.f32 %v1019, 0.00022905065
        %v1084 = vmul.f32 %v1020, 0.00022905065
        %v1085 = vmul.f32 %v1021, 0.00022905065
        %v1086 = vmul.f32 %v1022, 0.00022905065
        %v1087 = vmul.f32 %v1023, 0.00022905065
        %v1088 = vmul.f32 %v1024, 0.00022905065
        %v1089 = vmul.f32 %v1025, 0.00022905065
        %v1090 = vmul.f32 %v1026, 0.00022905065
        %v1091 = vmul.f32 %v1027, 0.00022905065
        %v1092 = vmul.f32 %v1028, 0.00022905065
        %v1093 = vmul.f32 %v1029, 0.00022905065
        %v1094 = vmul.f32 %v1030, 0.00022905065
        %v1095 = vmul.f32 %v1031, 0.00022905065
        %v1096 = vmul.f32 %v1032, 0.00022905065
        %v1097 = vmul.f32 %v1033, 0.00022905065
        %v1098 = vmul.f32 %v1034, 0.00022905065
        %v1099 = vmul.f32 %v1035, 0.00022905065
        %v1100 = vmul.f32 %v1036, 0.00022905065
        %v1101 = vmul.f32 %v1037, 0.00022905065
        %v1102 = vmul.f32 %v1038, 0.00022905065
        %v1103 = vmul.f32 %v1039, 0.00022905065
        %v1104 = vmul.f32 %v1040, 0.00022905065
        %v1105 = vmul.f32 %v1041, 0.00022905065
        %v1106 = vmul.f32 %v1042, 0.00022905065
        %v1107 = vmul.f32 %v1043, 0.00022905065
        %v1108 = vmul.f32 %v1044, 0.00022905065
        %v1109 = vmul.f32 %v1045, 0.00022905065
        %v1110 = vmul.f32 %v1046, 0.00022905065
        %v1111 = vmul.f32 %v1047, 0.00022905065
        %v1112 = vmul.f32 %v1048, 0.00022905065
        %v1113 = vmul.f32 %v1049, 0.00022905065
        %v1114 = vmul.f32 %v1050, 0.00022905065
        %v1115 = vmul.f32 %v1051, 0.00022905065
        %v1116 = vmul.f32 %v1052, 0.00022905065
        %v1117 = vmul.f32 %v1053, 0.00022905065
        %v1118 = vmul.f32 %v1054, 0.00022905065
        %v1119 = vmul.f32 %v1055, 0.00022905065
        %v1120 = vmul.f32 %v1056, 0.00022905065
        %v1121 = vmul.f32 %v1057, 0.00022905065
        %v1122 = vmul.f32 %v1058, 0.00022905065
        %v1123 = vmul.f32 %v1059, 0.00022905065
        %v1124 = vmul.f32 %v1060, 0.00022905065
        %v1125 = vmul.f32 %v1061, 0.00022905065
        %v1126 = vmul.f32 %v1062, 0.00022905065
        %v1127 = vmul.f32 %v1063, 0.00022905065
        %v1128 = vmul.f32 %v1064, 0.00022905065
        %v1129 = vmul.f32 %v1065, 0.00022905065
        %v1130 = vmul.f32 %v1066, 0.00022905065
        %v1131 = vmul.f32 %v1067, 0.00022905065
        %v1132 = vmul.f32 %v1068, 0.00022905065
        %v1133 = vmul.f32 %v1069, 0.00022905065
        %v1134 = vmul.f32 %v1070, 0.00022905065
        %v1135 = vmul.f32 %v1071, 0.00022905065
        %v1136 = vadd.f32 %v1072, 0.003408291
        %v1137 = vadd.f32 %v1073, 0.003408291
        %v1138 = vadd.f32 %v1074, 0.003408291
        %v1139 = vadd.f32 %v1075, 0.003408291
        %v1140 = vadd.f32 %v1076, 0.003408291
        %v1141 = vadd.f32 %v1077, 0.003408291
        %v1142 = vadd.f32 %v1078, 0.003408291
        %v1143 = vadd.f32 %v1079, 0.003408291
        %v1144 = vadd.f32 %v1080, 0.003408291
        %v1145 = vadd.f32 %v1081, 0.003408291
        %v1146 = vadd.f32 %v1082, 0.003408291
        %v1147 = vadd.f32 %v1083, 0.003408291
        %v1148 = vadd.f32 %v1084, 0.003408291
        %v1149 = vadd.f32 %v1085, 0.003408291
        %v1150 = vadd.f32 %v1086, 0.003408291
        %v1151 = vadd.f32 %v1087, 0.003408291
        %v1152 = vadd.f32 %v1088, 0.003408291
        %v1153 = vadd.f32 %v1089, 0.003408291
        %v1154 = vadd.f32 %v1090, 0.003408291
        %v1155 = vadd.f32 %v1091, 0.003408291
        %v1156 = vadd.f32 %v1092, 0.003408291
        %v1157 = vadd.f32 %v1093, 0.003408291
        %v1158 = vadd.f32 %v1094, 0.003408291
        %v1159 = vadd.f32 %v1095, 0.003408291
        %v1160 = vadd.f32 %v1096, 0.003408291
        %v1161 = vadd.f32 %v1097, 0.003408291
        %v1162 = vadd.f32 %v1098, 0.003408291
        %v1163 = vadd.f32 %v1099, 0.003408291
        %v1164 = vadd.f32 %v1100, 0.003408291
        %v1165 = vadd.f32 %v1101, 0.003408291
        %v1166 = vadd.f32 %v1102, 0.003408291
        %v1167 = vadd.f32 %v1103, 0.003408291
        %v1168 = vadd.f32 %v1104, 0.003408291
        %v1169 = vadd.f32 %v1105, 0.003408291
        %v1170 = vadd.f32 %v1106, 0.003408291
        %v1171 = vadd.f32 %v1107, 0.003408291
        %v1172 = vadd.f32 %v1108, 0.003408291
        %v1173 = vadd.f32 %v1109, 0.003408291
        %v1174 = vadd.f32 %v1110, 0.003408291
        %v1175 = vadd.f32 %v1111, 0.003408291
        %v1176 = vadd.f32 %v1112, 0.003408291
        %v1177 = vadd.f32 %v1113, 0.003408291
        %v1178 = vadd.f32 %v1114, 0.003408291
        %v1179 = vadd.f32 %v1115, 0.003408291
        %v1180 = vadd.f32 %v1116, 0.003408291
        %v1181 = vadd.f32 %v1117, 0.003408291
        %v1182 = vadd.f32 %v1118, 0.003408291
        %v1183 = vadd.f32 %v1119, 0.003408291
        %v1184 = vadd.f32 %v1120, 0.003408291
        %v1185 = vadd.f32 %v1121, 0.003408291
        %v1186 = vadd.f32 %v1122, 0.003408291
        %v1187 = vadd.f32 %v1123, 0.003408291
        %v1188 = vadd.f32 %v1124, 0.003408291
        %v1189 = vadd.f32 %v1125, 0.003408291
        %v1190 = vadd.f32 %v1126, 0.003408291
        %v1191 = vadd.f32 %v1127, 0.003408291
        %v1192 = vadd.f32 %v1128, 0.003408291
        %v1193 = vadd.f32 %v1129, 0.003408291
        %v1194 = vadd.f32 %v1130, 0.003408291
        %v1195 = vadd.f32 %v1131, 0.003408291
        %v1196 = vadd.f32 %v1132, 0.003408291
        %v1197 = vadd.f32 %v1133, 0.003408291
        %v1198 = vadd.f32 %v1134, 0.003408291
        %v1199 = vadd.f32 %v1135, 0.003408291
        %v1200 = vmul.f32 %v1136, %v1008
        %v1201 = vmul.f32 %v1137, %v1009
        %v1202 = vmul.f32 %v1138, %v1010
        %v1203 = vmul.f32 %v1139, %v1011
        %v1204 = vmul.f32 %v1140, %v1012
        %v1205 = vmul.f32 %v1141, %v1013
        %v1206 = vmul.f32 %v1142, %v1014
        %v1207 = vmul.f32 %v1143, %v1015
        %v1208 = vmul.f32 %v1144, %v1016
        %v1209 = vmul.f32 %v1145, %v1017
        %v1210 = vmul.f32 %v1146, %v1018
        %v1211 = vmul.f32 %v1147, %v1019
        %v1212 = vmul.f32 %v1148, %v1020
        %v1213 = vmul.f32 %v1149, %v1021
        %v1214 = vmul.f32 %v1150, %v1022
        %v1215 = vmul.f32 %v1151, %v1023
        %v1216 = vmul.f32 %v1152, %v1024
        %v1217 = vmul.f32 %v1153, %v1025
        %v1218 = vmul.f32 %v1154, %v1026
        %v1219 = vmul.f32 %v1155, %v1027
        %v1220 = vmul.f32 %v1156, %v1028
        %v1221 = vmul.f32 %v1157, %v1029
        %v1222 = vmul.f32 %v1158, %v1030
        %v1223 = vmul.f32 %v1159, %v1031
        %v1224 = vmul.f32 %v1160, %v1032
        %v1225 = vmul.f32 %v1161, %v1033
        %v1226 = vmul.f32 %v1162, %v1034
        %v1227 = vmul.f32 %v1163, %v1035
        %v1228 = vmul.f32 %v1164, %v1036
        %v1229 = vmul.f32 %v1165, %v1037
        %v1230 = vmul.f32 %v1166, %v1038
        %v1231 = vmul.f32 %v1167, %v1039
        %v1232 = vmul.f32 %v1168, %v1040
        %v1233 = vmul.f32 %v1169, %v1041
        %v1234 = vmul.f32 %v1170, %v1042
        %v1235 = vmul.f32 %v1171, %v1043
        %v1236 = vmul.f32 %v1172, %v1044
        %v1237 = vmul.f32 %v1173, %v1045
        %v1238 = vmul.f32 %v1174, %v1046
        %v1239 = vmul.f32 %v1175, %v1047
        %v1240 = vmul.f32 %v1176, %v1048
        %v1241 = vmul.f32 %v1177, %v1049
        %v1242 = vmul.f32 %v1178, %v1050
        %v1243 = vmul.f32 %v1179, %v1051
        %v1244 = vmul.f32 %v1180, %v1052
        %v1245 = vmul.f32 %v1181, %v1053
        %v1246 = vmul.f32 %v1182, %v1054
        %v1247 = vmul.f32 %v1183, %v1055
        %v1248 = vmul.f32 %v1184, %v1056
        %v1249 = vmul.f32 %v1185, %v1057
        %v1250 = vmul.f32 %v1186, %v1058
        %v1251 = vmul.f32 %v1187, %v1059
        %v1252 = vmul.f32 %v1188, %v1060
        %v1253 = vmul.f32 %v1189, %v1061
        %v1254 = vmul.f32 %v1190, %v1062
        %v1255 = vmul.f32 %v1191, %v1063
        %v1256 = vmul.f32 %v1192, %v1064
        %v1257 = vmul.f32 %v1193, %v1065
        %v1258 = vmul.f32 %v1194, %v1066
        %v1259 = vmul.f32 %v1195, %v1067
        %v1260 = vmul.f32 %v1196, %v1068
        %v1261 = vmul.f32 %v1197, %v1069
        %v1262 = vmul.f32 %v1198, %v1070
        %v1263 = vmul.f32 %v1199, %v1071
        %v1264 = vadd.f32 %v1200, 0.050955694
        %v1265 = vadd.f32 %v1201, 0.050955694
        %v1266 = vadd.f32 %v1202, 0.050955694
        %v1267 = vadd.f32 %v1203, 0.050955694
        %v1268 = vadd.f32 %v1204, 0.050955694
        %v1269 = vadd.f32 %v1205, 0.050955694
        %v1270 = vadd.f32 %v1206, 0.050955694
        %v1271 = vadd.f32 %v1207, 0.050955694
        %v1272 = vadd.f32 %v1208, 0.050955694
        %v1273 = vadd.f32 %v1209, 0.050955694
        %v1274 = vadd.f32 %v1210, 0.050955694
        %v1275 = vadd.f32 %v1211, 0.050955694
        %v1276 = vadd.f32 %v1212, 0.050955694
        %v1277 = vadd.f32 %v1213, 0.050955694
        %v1278 = vadd.f32 %v1214, 0.050955694
        %v1279 = vadd.f32 %v1215, 0.050955694
        %v1280 = vadd.f32 %v1216, 0.050955694
        %v1281 = vadd.f32 %v1217, 0.050955694
        %v1282 = vadd.f32 %v1218, 0.050955694
        %v1283 = vadd.f32 %v1219, 0.050955694
        %v1284 = vadd.f32 %v1220, 0.050955694
        %v1285 = vadd.f32 %v1221, 0.050955694
        %v1286 = vadd.f32 %v1222, 0.050955694
        %v1287 = vadd.f32 %v1223, 0.050955694
        %v1288 = vadd.f32 %v1224, 0.050955694
        %v1289 = vadd.f32 %v1225, 0.050955694
        %v1290 = vadd.f32 %v1226, 0.050955694
        %v1291 = vadd.f32 %v1227, 0.050955694
        %v1292 = vadd.f32 %v1228, 0.050955694
        %v1293 = vadd.f32 %v1229, 0.050955694
        %v1294 = vadd.f32 %v1230, 0.050955694
        %v1295 = vadd.f32 %v1231, 0.050955694
        %v1296 = vadd.f32 %v1232, 0.050955694
        %v1297 = vadd.f32 %v1233, 0.050955694
        %v1298 = vadd.f32 %v1234, 0.050955694
        %v1299 = vadd.f32 %v1235, 0.050955694
        %v1300 = vadd.f32 %v1236, 0.050955694
        %v1301 = vadd.f32 %v1237, 0.050955694
        %v1302 = vadd.f32 %v1238, 0.050955694
        %v1303 = vadd.f32 %v1239, 0.050955694
        %v1304 = vadd.f32 %v1240, 0.050955694
        %v1305 = vadd.f32 %v1241, 0.050955694
        %v1306 = vadd.f32 %v1242, 0.050955694
        %v1307 = vadd.f32 %v1243, 0.050955694
        %v1308 = vadd.f32 %v1244, 0.050955694
        %v1309 = vadd.f32 %v1245, 0.050955694
        %v1310 = vadd.f32 %v1246, 0.050955694
        %v1311 = vadd.f32 %v1247, 0.050955694
        %v1312 = vadd.f32 %v1248, 0.050955694
        %v1313 = vadd.f32 %v1249, 0.050955694
        %v1314 = vadd.f32 %v1250, 0.050955694
        %v1315 = vadd.f32 %v1251, 0.050955694
        %v1316 = vadd.f32 %v1252, 0.050955694
        %v1317 = vadd.f32 %v1253, 0.050955694
        %v1318 = vadd.f32 %v1254, 0.050955694
        %v1319 = vadd.f32 %v1255, 0.050955694
        %v1320 = vadd.f32 %v1256, 0.050955694
        %v1321 = vadd.f32 %v1257, 0.050955694
        %v1322 = vadd.f32 %v1258, 0.050955694
        %v1323 = vadd.f32 %v1259, 0.050955694
        %v1324 = vadd.f32 %v1260, 0.050955694
        %v1325 = vadd.f32 %v1261, 0.050955694
        %v1326 = vadd.f32 %v1262, 0.050955694
        %v1327 = vadd.f32 %v1263, 0.050955694
        %v1328 = vmul.f32 %v1264, %v1008
        %v1329 = vmul.f32 %v1265, %v1009
        %v1330 = vmul.f32 %v1266, %v1010
        %v1331 = vmul.f32 %v1267, %v1011
        %v1332 = vmul.f32 %v1268, %v1012
        %v1333 = vmul.f32 %v1269, %v1013
        %v1334 = vmul.f32 %v1270, %v1014
        %v1335 = vmul.f32 %v1271, %v1015
        %v1336 = vmul.f32 %v1272, %v1016
        %v1337 = vmul.f32 %v1273, %v1017
        %v1338 = vmul.f32 %v1274, %v1018
        %v1339 = vmul.f32 %v1275, %v1019
        %v1340 = vmul.f32 %v1276, %v1020
        %v1341 = vmul.f32 %v1277, %v1021
        %v1342 = vmul.f32 %v1278, %v1022
        %v1343 = vmul.f32 %v1279, %v1023
        %v1344 = vmul.f32 %v1280, %v1024
        %v1345 = vmul.f32 %v1281, %v1025
        %v1346 = vmul.f32 %v1282, %v1026
        %v1347 = vmul.f32 %v1283, %v1027
        %v1348 = vmul.f32 %v1284, %v1028
        %v1349 = vmul.f32 %v1285, %v1029
        %v1350 = vmul.f32 %v1286, %v1030
        %v1351 = vmul.f32 %v1287, %v1031
        %v1352 = vmul.f32 %v1288, %v1032
        %v1353 = vmul.f32 %v1289, %v1033
        %v1354 = vmul.f32 %v1290, %v1034
        %v1355 = vmul.f32 %v1291, %v1035
        %v1356 = vmul.f32 %v1292, %v1036
        %v1357 = vmul.f32 %v1293, %v1037
        %v1358 = vmul.f32 %v1294, %v1038
        %v1359 = vmul.f32 %v1295, %v1039
        %v1360 = vmul.f32 %v1296, %v1040
        %v1361 = vmul.f32 %v1297, %v1041
        %v1362 = vmul.f32 %v1298, %v1042
        %v1363 = vmul.f32 %v1299, %v1043
        %v1364 = vmul.f32 %v1300, %v1044
        %v1365 = vmul.f32 %v1301, %v1045
        %v1366 = vmul.f32 %v1302, %v1046
        %v1367 = vmul.f32 %v1303, %v1047
        %v1368 = vmul.f32 %v1304, %v1048
        %v1369 = vmul.f32 %v1305, %v1049
        %v1370 = vmul.f32 %v1306, %v1050
        %v1371 = vmul.f32 %v1307, %v1051
        %v1372 = vmul.f32 %v1308, %v1052
        %v1373 = vmul.f32 %v1309, %v1053
        %v1374 = vmul.f32 %v1310, %v1054
        %v1375 = vmul.f32 %v1311, %v1055
        %v1376 = vmul.f32 %v1312, %v1056
        %v1377 = vmul.f32 %v1313, %v1057
        %v1378 = vmul.f32 %v1314, %v1058
        %v1379 = vmul.f32 %v1315, %v1059
        %v1380 = vmul.f32 %v1316, %v1060
        %v1381 = vmul.f32 %v1317, %v1061
        %v1382 = vmul.f32 %v1318, %v1062
        %v1383 = vmul.f32 %v1319, %v1063
        %v1384 = vmul.f32 %v1320, %v1064
        %v1385 = vmul.f32 %v1321, %v1065
        %v1386 = vmul.f32 %v1322, %v1066
        %v1387 = vmul.f32 %v1323, %v1067
        %v1388 = vmul.f32 %v1324, %v1068
        %v1389 = vmul.f32 %v1325, %v1069
        %v1390 = vmul.f32 %v1326, %v1070
        %v1391 = vmul.f32 %v1327, %v1071
        %v1392 = vadd.f32 %v1328, 0.18520832
        %v1393 = vadd.f32 %v1329, 0.18520832
        %v1394 = vadd.f32 %v1330, 0.18520832
        %v1395 = vadd.f32 %v1331, 0.18520832
        %v1396 = vadd.f32 %v1332, 0.18520832
        %v1397 = vadd.f32 %v1333, 0.18520832
        %v1398 = vadd.f32 %v1334, 0.18520832
        %v1399 = vadd.f32 %v1335, 0.18520832
        %v1400 = vadd.f32 %v1336, 0.18520832
        %v1401 = vadd.f32 %v1337, 0.18520832
        %v1402 = vadd.f32 %v1338, 0.18520832
        %v1403 = vadd.f32 %v1339, 0.18520832
        %v1404 = vadd.f32 %v1340, 0.18520832
        %v1405 = vadd.f32 %v1341, 0.18520832
        %v1406 = vadd.f32 %v1342, 0.18520832
        %v1407 = vadd.f32 %v1343, 0.18520832
        %v1408 = vadd.f32 %v1344, 0.18520832
        %v1409 = vadd.f32 %v1345, 0.18520832
        %v1410 = vadd.f32 %v1346, 0.18520832
        %v1411 = vadd.f32 %v1347, 0.18520832
        %v1412 = vadd.f32 %v1348, 0.18520832
        %v1413 = vadd.f32 %v1349, 0.18520832
        %v1414 = vadd.f32 %v1350, 0.18520832
        %v1415 = vadd.f32 %v1351, 0.18520832
        %v1416 = vadd.f32 %v1352, 0.18520832
        %v1417 = vadd.f32 %v1353, 0.18520832
        %v1418 = vadd.f32 %v1354, 0.18520832
        %v1419 = vadd.f32 %v1355, 0.18520832
        %v1420 = vadd.f32 %v1356, 0.18520832
        %v1421 = vadd.f32 %v1357, 0.18520832
        %v1422 = vadd.f32 %v1358, 0.18520832
        %v1423 = vadd.f32 %v1359, 0.18520832
        %v1424 = vadd.f32 %v1360, 0.18520832
        %v1425 = vadd.f32 %v1361, 0.18520832
        %v1426 = vadd.f32 %v1362, 0.18520832
        %v1427 = vadd.f32 %v1363, 0.18520832
        %v1428 = vadd.f32 %v1364, 0.18520832
        %v1429 = vadd.f32 %v1365, 0.18520832
        %v1430 = vadd.f32 %v1366, 0.18520832
        %v1431 = vadd.f32 %v1367, 0.18520832
        %v1432 = vadd.f32 %v1368, 0.18520832
        %v1433 = vadd.f32 %v1369, 0.18520832
        %v1434 = vadd.f32 %v1370, 0.18520832
        %v1435 = vadd.f32 %v1371, 0.18520832
        %v1436 = vadd.f32 %v1372, 0.18520832
        %v1437 = vadd.f32 %v1373, 0.18520832
        %v1438 = vadd.f32 %v1374, 0.18520832
        %v1439 = vadd.f32 %v1375, 0.18520832
        %v1440 = vadd.f32 %v1376, 0.18520832
        %v1441 = vadd.f32 %v1377, 0.18520832
        %v1442 = vadd.f32 %v1378, 0.18520832
        %v1443 = vadd.f32 %v1379, 0.18520832
        %v1444 = vadd.f32 %v1380, 0.18520832
        %v1445 = vadd.f32 %v1381, 0.18520832
        %v1446 = vadd.f32 %v1382, 0.18520832
        %v1447 = vadd.f32 %v1383, 0.18520832
        %v1448 = vadd.f32 %v1384, 0.18520832
        %v1449 = vadd.f32 %v1385, 0.18520832
        %v1450 = vadd.f32 %v1386, 0.18520832
        %v1451 = vadd.f32 %v1387, 0.18520832
        %v1452 = vadd.f32 %v1388, 0.18520832
        %v1453 = vadd.f32 %v1389, 0.18520832
        %v1454 = vadd.f32 %v1390, 0.18520832
        %v1455 = vadd.f32 %v1391, 0.18520832
        %v1456 = vmul.f32 %v1392, %v1008
        %v1457 = vmul.f32 %v1393, %v1009
        %v1458 = vmul.f32 %v1394, %v1010
        %v1459 = vmul.f32 %v1395, %v1011
        %v1460 = vmul.f32 %v1396, %v1012
        %v1461 = vmul.f32 %v1397, %v1013
        %v1462 = vmul.f32 %v1398, %v1014
        %v1463 = vmul.f32 %v1399, %v1015
        %v1464 = vmul.f32 %v1400, %v1016
        %v1465 = vmul.f32 %v1401, %v1017
        %v1466 = vmul.f32 %v1402, %v1018
        %v1467 = vmul.f32 %v1403, %v1019
        %v1468 = vmul.f32 %v1404, %v1020
        %v1469 = vmul.f32 %v1405, %v1021
        %v1470 = vmul.f32 %v1406, %v1022
        %v1471 = vmul.f32 %v1407, %v1023
        %v1472 = vmul.f32 %v1408, %v1024
        %v1473 = vmul.f32 %v1409, %v1025
        %v1474 = vmul.f32 %v1410, %v1026
        %v1475 = vmul.f32 %v1411, %v1027
        %v1476 = vmul.f32 %v1412, %v1028
        %v1477 = vmul.f32 %v1413, %v1029
        %v1478 = vmul.f32 %v1414, %v1030
        %v1479 = vmul.f32 %v1415, %v1031
        %v1480 = vmul.f32 %v1416, %v1032
        %v1481 = vmul.f32 %v1417, %v1033
        %v1482 = vmul.f32 %v1418, %v1034
        %v1483 = vmul.f32 %v1419, %v1035
        %v1484 = vmul.f32 %v1420, %v1036
        %v1485 = vmul.f32 %v1421, %v1037
        %v1486 = vmul.f32 %v1422, %v1038
        %v1487 = vmul.f32 %v1423, %v1039
        %v1488 = vmul.f32 %v1424, %v1040
        %v1489 = vmul.f32 %v1425, %v1041
        %v1490 = vmul.f32 %v1426, %v1042
        %v1491 = vmul.f32 %v1427, %v1043
        %v1492 = vmul.f32 %v1428, %v1044
        %v1493 = vmul.f32 %v1429, %v1045
        %v1494 = vmul.f32 %v1430, %v1046
        %v1495 = vmul.f32 %v1431, %v1047
        %v1496 = vmul.f32 %v1432, %v1048
        %v1497 = vmul.f32 %v1433, %v1049
        %v1498 = vmul.f32 %v1434, %v1050
        %v1499 = vmul.f32 %v1435, %v1051
        %v1500 = vmul.f32 %v1436, %v1052
        %v1501 = vmul.f32 %v1437, %v1053
        %v1502 = vmul.f32 %v1438, %v1054
        %v1503 = vmul.f32 %v1439, %v1055
        %v1504 = vmul.f32 %v1440, %v1056
        %v1505 = vmul.f32 %v1441, %v1057
        %v1506 = vmul.f32 %v1442, %v1058
        %v1507 = vmul.f32 %v1443, %v1059
        %v1508 = vmul.f32 %v1444, %v1060
        %v1509 = vmul.f32 %v1445, %v1061
        %v1510 = vmul.f32 %v1446, %v1062
        %v1511 = vmul.f32 %v1447, %v1063
        %v1512 = vmul.f32 %v1448, %v1064
        %v1513 = vmul.f32 %v1449, %v1065
        %v1514 = vmul.f32 %v1450, %v1066
        %v1515 = vmul.f32 %v1451, %v1067
        %v1516 = vmul.f32 %v1452, %v1068
        %v1517 = vmul.f32 %v1453, %v1069
        %v1518 = vmul.f32 %v1454, %v1070
        %v1519 = vmul.f32 %v1455, %v1071
        %v1520 = vadd.f32 %v1456, 1.1283791
        %v1521 = vadd.f32 %v1457, 1.1283791
        %v1522 = vadd.f32 %v1458, 1.1283791
        %v1523 = vadd.f32 %v1459, 1.1283791
        %v1524 = vadd.f32 %v1460, 1.1283791
        %v1525 = vadd.f32 %v1461, 1.1283791
        %v1526 = vadd.f32 %v1462, 1.1283791
        %v1527 = vadd.f32 %v1463, 1.1283791
        %v1528 = vadd.f32 %v1464, 1.1283791
        %v1529 = vadd.f32 %v1465, 1.1283791
        %v1530 = vadd.f32 %v1466, 1.1283791
        %v1531 = vadd.f32 %v1467, 1.1283791
        %v1532 = vadd.f32 %v1468, 1.1283791
        %v1533 = vadd.f32 %v1469, 1.1283791
        %v1534 = vadd.f32 %v1470, 1.1283791
        %v1535 = vadd.f32 %v1471, 1.1283791
        %v1536 = vadd.f32 %v1472, 1.1283791
        %v1537 = vadd.f32 %v1473, 1.1283791
        %v1538 = vadd.f32 %v1474, 1.1283791
        %v1539 = vadd.f32 %v1475, 1.1283791
        %v1540 = vadd.f32 %v1476, 1.1283791
        %v1541 = vadd.f32 %v1477, 1.1283791
        %v1542 = vadd.f32 %v1478, 1.1283791
        %v1543 = vadd.f32 %v1479, 1.1283791
        %v1544 = vadd.f32 %v1480, 1.1283791
        %v1545 = vadd.f32 %v1481, 1.1283791
        %v1546 = vadd.f32 %v1482, 1.1283791
        %v1547 = vadd.f32 %v1483, 1.1283791
        %v1548 = vadd.f32 %v1484, 1.1283791
        %v1549 = vadd.f32 %v1485, 1.1283791
        %v1550 = vadd.f32 %v1486, 1.1283791
        %v1551 = vadd.f32 %v1487, 1.1283791
        %v1552 = vadd.f32 %v1488, 1.1283791
        %v1553 = vadd.f32 %v1489, 1.1283791
        %v1554 = vadd.f32 %v1490, 1.1283791
        %v1555 = vadd.f32 %v1491, 1.1283791
        %v1556 = vadd.f32 %v1492, 1.1283791
        %v1557 = vadd.f32 %v1493, 1.1283791
        %v1558 = vadd.f32 %v1494, 1.1283791
        %v1559 = vadd.f32 %v1495, 1.1283791
        %v1560 = vadd.f32 %v1496, 1.1283791
        %v1561 = vadd.f32 %v1497, 1.1283791
        %v1562 = vadd.f32 %v1498, 1.1283791
        %v1563 = vadd.f32 %v1499, 1.1283791
        %v1564 = vadd.f32 %v1500, 1.1283791
        %v1565 = vadd.f32 %v1501, 1.1283791
        %v1566 = vadd.f32 %v1502, 1.1283791
        %v1567 = vadd.f32 %v1503, 1.1283791
        %v1568 = vadd.f32 %v1504, 1.1283791
        %v1569 = vadd.f32 %v1505, 1.1283791
        %v1570 = vadd.f32 %v1506, 1.1283791
        %v1571 = vadd.f32 %v1507, 1.1283791
        %v1572 = vadd.f32 %v1508, 1.1283791
        %v1573 = vadd.f32 %v1509, 1.1283791
        %v1574 = vadd.f32 %v1510, 1.1283791
        %v1575 = vadd.f32 %v1511, 1.1283791
        %v1576 = vadd.f32 %v1512, 1.1283791
        %v1577 = vadd.f32 %v1513, 1.1283791
        %v1578 = vadd.f32 %v1514, 1.1283791
        %v1579 = vadd.f32 %v1515, 1.1283791
        %v1580 = vadd.f32 %v1516, 1.1283791
        %v1581 = vadd.f32 %v1517, 1.1283791
        %v1582 = vadd.f32 %v1518, 1.1283791
        %v1583 = vadd.f32 %v1519, 1.1283791
        %v1584 = vmul.f32 %v1008, -1.1791603e-07
        %v1585 = vmul.f32 %v1009, -1.1791603e-07
        %v1586 = vmul.f32 %v1010, -1.1791603e-07
        %v1587 = vmul.f32 %v1011, -1.1791603e-07
        %v1588 = vmul.f32 %v1012, -1.1791603e-07
        %v1589 = vmul.f32 %v1013, -1.1791603e-07
        %v1590 = vmul.f32 %v1014, -1.1791603e-07
        %v1591 = vmul.f32 %v1015, -1.1791603e-07
        %v1592 = vmul.f32 %v1016, -1.1791603e-07
        %v1593 = vmul.f32 %v1017, -1.1791603e-07
        %v1594 = vmul.f32 %v1018, -1.1791603e-07
        %v1595 = vmul.f32 %v1019, -1.1791603e-07
        %v1596 = vmul.f32 %v1020, -1.1791603e-07
        %v1597 = vmul.f32 %v1021, -1.1791603e-07
        %v1598 = vmul.f32 %v1022, -1.1791603e-07
        %v1599 = vmul.f32 %v1023, -1.1791603e-07
        %v1600 = vmul.f32 %v1024, -1.1791603e-07
        %v1601 = vmul.f32 %v1025, -1.1791603e-07
        %v1602 = vmul.f32 %v1026, -1.1791603e-07
        %v1603 = vmul.f32 %v1027, -1.1791603e-07
        %v1604 = vmul.f32 %v1028, -1.1791603e-07
        %v1605 = vmul.f32 %v1029, -1.1791603e-07
        %v1606 = vmul.f32 %v1030, -1.1791603e-07
        %v1607 = vmul.f32 %v1031, -1.1791603e-07
        %v1608 = vmul.f32 %v1032, -1.1791603e-07
        %v1609 = vmul.f32 %v1033, -1.1791603e-07
        %v1610 = vmul.f32 %v1034, -1.1791603e-07
        %v1611 = vmul.f32 %v1035, -1.1791603e-07
        %v1612 = vmul.f32 %v1036, -1.1791603e-07
        %v1613 = vmul.f32 %v1037, -1.1791603e-07
        %v1614 = vmul.f32 %v1038, -1.1791603e-07
        %v1615 = vmul.f32 %v1039, -1.1791603e-07
        %v1616 = vmul.f32 %v1040, -1.1791603e-07
        %v1617 = vmul.f32 %v1041, -1.1791603e-07
        %v1618 = vmul.f32 %v1042, -1.1791603e-07
        %v1619 = vmul.f32 %v1043, -1.1791603e-07
        %v1620 = vmul.f32 %v1044, -1.1791603e-07
        %v1621 = vmul.f32 %v1045, -1.1791603e-07
        %v1622 = vmul.f32 %v1046, -1.1791603e-07
        %v1623 = vmul.f32 %v1047, -1.1791603e-07
        %v1624 = vmul.f32 %v1048, -1.1791603e-07
        %v1625 = vmul.f32 %v1049, -1.1791603e-07
        %v1626 = vmul.f32 %v1050, -1.1791603e-07
        %v1627 = vmul.f32 %v1051, -1.1791603e-07
        %v1628 = vmul.f32 %v1052, -1.1791603e-07
        %v1629 = vmul.f32 %v1053, -1.1791603e-07
        %v1630 = vmul.f32 %v1054, -1.1791603e-07
        %v1631 = vmul.f32 %v1055, -1.1791603e-07
        %v1632 = vmul.f32 %v1056, -1.1791603e-07
        %v1633 = vmul.f32 %v1057, -1.1791603e-07
        %v1634 = vmul.f32 %v1058, -1.1791603e-07
        %v1635 = vmul.f32 %v1059, -1.1791603e-07
        %v1636 = vmul.f32 %v1060, -1.1791603e-07
        %v1637 = vmul.f32 %v1061, -1.1791603e-07
        %v1638 = vmul.f32 %v1062, -1.1791603e-07
        %v1639 = vmul.f32 %v1063, -1.1791603e-07
        %v1640 = vmul.f32 %v1064, -1.1791603e-07
        %v1641 = vmul.f32 %v1065, -1.1791603e-07
        %v1642 = vmul.f32 %v1066, -1.1791603e-07
        %v1643 = vmul.f32 %v1067, -1.1791603e-07
        %v1644 = vmul.f32 %v1068, -1.1791603e-07
        %v1645 = vmul.f32 %v1069, -1.1791603e-07
        %v1646 = vmul.f32 %v1070, -1.1791603e-07
        %v1647 = vmul.f32 %v1071, -1.1791603e-07
        %v1648 = vadd.f32 %v1584, 2.3547966e-05
        %v1649 = vadd.f32 %v1585, 2.3547966e-05
        %v1650 = vadd.f32 %v1586, 2.3547966e-05
        %v1651 = vadd.f32 %v1587, 2.3547966e-05
        %v1652 = vadd.f32 %v1588, 2.3547966e-05
        %v1653 = vadd.f32 %v1589, 2.3547966e-05
        %v1654 = vadd.f32 %v1590, 2.3547966e-05
        %v1655 = vadd.f32 %v1591, 2.3547966e-05
        %v1656 = vadd.f32 %v1592, 2.3547966e-05
        %v1657 = vadd.f32 %v1593, 2.3547966e-05
        %v1658 = vadd.f32 %v1594, 2.3547966e-05
        %v1659 = vadd.f32 %v1595, 2.3547966e-05
        %v1660 = vadd.f32 %v1596, 2.3547966e-05
        %v1661 = vadd.f32 %v1597, 2.3547966e-05
        %v1662 = vadd.f32 %v1598, 2.3547966e-05
        %v1663 = vadd.f32 %v1599, 2.3547966e-05
        %v1664 = vadd.f32 %v1600, 2.3547966e-05
        %v1665 = vadd.f32 %v1601, 2.3547966e-05
        %v1666 = vadd.f32 %v1602, 2.3547966e-05
        %v1667 = vadd.f32 %v1603, 2.3547966e-05
        %v1668 = vadd.f32 %v1604, 2.3547966e-05
        %v1669 = vadd.f32 %v1605, 2.3547966e-05
        %v1670 = vadd.f32 %v1606, 2.3547966e-05
        %v1671 = vadd.f32 %v1607, 2.3547966e-05
        %v1672 = vadd.f32 %v1608, 2.3547966e-05
        %v1673 = vadd.f32 %v1609, 2.3547966e-05
        %v1674 = vadd.f32 %v1610, 2.3547966e-05
        %v1675 = vadd.f32 %v1611, 2.3547966e-05
        %v1676 = vadd.f32 %v1612, 2.3547966e-05
        %v1677 = vadd.f32 %v1613, 2.3547966e-05
        %v1678 = vadd.f32 %v1614, 2.3547966e-05
        %v1679 = vadd.f32 %v1615, 2.3547966e-05
        %v1680 = vadd.f32 %v1616, 2.3547966e-05
        %v1681 = vadd.f32 %v1617, 2.3547966e-05
        %v1682 = vadd.f32 %v1618, 2.3547966e-05
        %v1683 = vadd.f32 %v1619, 2.3547966e-05
        %v1684 = vadd.f32 %v1620, 2.3547966e-05
        %v1685 = vadd.f32 %v1621, 2.3547966e-05
        %v1686 = vadd.f32 %v1622, 2.3547966e-05
        %v1687 = vadd.f32 %v1623, 2.3547966e-05
        %v1688 = vadd.f32 %v1624, 2.3547966e-05
        %v1689 = vadd.f32 %v1625, 2.3547966e-05
        %v1690 = vadd.f32 %v1626, 2.3547966e-05
        %v1691 = vadd.f32 %v1627, 2.3547966e-05
        %v1692 = vadd.f32 %v1628, 2.3547966e-05
        %v1693 = vadd.f32 %v1629, 2.3547966e-05
        %v1694 = vadd.f32 %v1630, 2.3547966e-05
        %v1695 = vadd.f32 %v1631, 2.3547966e-05
        %v1696 = vadd.f32 %v1632, 2.3547966e-05
        %v1697 = vadd.f32 %v1633, 2.3547966e-05
        %v1698 = vadd.f32 %v1634, 2.3547966e-05
        %v1699 = vadd.f32 %v1635, 2.3547966e-05
        %v1700 = vadd.f32 %v1636, 2.3547966e-05
        %v1701 = vadd.f32 %v1637, 2.3547966e-05
        %v1702 = vadd.f32 %v1638, 2.3547966e-05
        %v1703 = vadd.f32 %v1639, 2.3547966e-05
        %v1704 = vadd.f32 %v1640, 2.3547966e-05
        %v1705 = vadd.f32 %v1641, 2.3547966e-05
        %v1706 = vadd.f32 %v1642, 2.3547966e-05
        %v1707 = vadd.f32 %v1643, 2.3547966e-05
        %v1708 = vadd.f32 %v1644, 2.3547966e-05
        %v1709 = vadd.f32 %v1645, 2.3547966e-05
        %v1710 = vadd.f32 %v1646, 2.3547966e-05
        %v1711 = vadd.f32 %v1647, 2.3547966e-05
        %v1712 = vmul.f32 %v1648, %v1008
        %v1713 = vmul.f32 %v1649, %v1009
        %v1714 = vmul.f32 %v1650, %v1010
        %v1715 = vmul.f32 %v1651, %v1011
        %v1716 = vmul.f32 %v1652, %v1012
        %v1717 = vmul.f32 %v1653, %v1013
        %v1718 = vmul.f32 %v1654, %v1014
        %v1719 = vmul.f32 %v1655, %v1015
        %v1720 = vmul.f32 %v1656, %v1016
        %v1721 = vmul.f32 %v1657, %v1017
        %v1722 = vmul.f32 %v1658, %v1018
        %v1723 = vmul.f32 %v1659, %v1019
        %v1724 = vmul.f32 %v1660, %v1020
        %v1725 = vmul.f32 %v1661, %v1021
        %v1726 = vmul.f32 %v1662, %v1022
        %v1727 = vmul.f32 %v1663, %v1023
        %v1728 = vmul.f32 %v1664, %v1024
        %v1729 = vmul.f32 %v1665, %v1025
        %v1730 = vmul.f32 %v1666, %v1026
        %v1731 = vmul.f32 %v1667, %v1027
        %v1732 = vmul.f32 %v1668, %v1028
        %v1733 = vmul.f32 %v1669, %v1029
        %v1734 = vmul.f32 %v1670, %v1030
        %v1735 = vmul.f32 %v1671, %v1031
        %v1736 = vmul.f32 %v1672, %v1032
        %v1737 = vmul.f32 %v1673, %v1033
        %v1738 = vmul.f32 %v1674, %v1034
        %v1739 = vmul.f32 %v1675, %v1035
        %v1740 = vmul.f32 %v1676, %v1036
        %v1741 = vmul.f32 %v1677, %v1037
        %v1742 = vmul.f32 %v1678, %v1038
        %v1743 = vmul.f32 %v1679, %v1039
        %v1744 = vmul.f32 %v1680, %v1040
        %v1745 = vmul.f32 %v1681, %v1041
        %v1746 = vmul.f32 %v1682, %v1042
        %v1747 = vmul.f32 %v1683, %v1043
        %v1748 = vmul.f32 %v1684, %v1044
        %v1749 = vmul.f32 %v1685, %v1045
        %v1750 = vmul.f32 %v1686, %v1046
        %v1751 = vmul.f32 %v1687, %v1047
        %v1752 = vmul.f32 %v1688, %v1048
        %v1753 = vmul.f32 %v1689, %v1049
        %v1754 = vmul.f32 %v1690, %v1050
        %v1755 = vmul.f32 %v1691, %v1051
        %v1756 = vmul.f32 %v1692, %v1052
        %v1757 = vmul.f32 %v1693, %v1053
        %v1758 = vmul.f32 %v1694, %v1054
        %v1759 = vmul.f32 %v1695, %v1055
        %v1760 = vmul.f32 %v1696, %v1056
        %v1761 = vmul.f32 %v1697, %v1057
        %v1762 = vmul.f32 %v1698, %v1058
        %v1763 = vmul.f32 %v1699, %v1059
        %v1764 = vmul.f32 %v1700, %v1060
        %v1765 = vmul.f32 %v1701, %v1061
        %v1766 = vmul.f32 %v1702, %v1062
        %v1767 = vmul.f32 %v1703, %v1063
        %v1768 = vmul.f32 %v1704, %v1064
        %v1769 = vmul.f32 %v1705, %v1065
        %v1770 = vmul.f32 %v1706, %v1066
        %v1771 = vmul.f32 %v1707, %v1067
        %v1772 = vmul.f32 %v1708, %v1068
        %v1773 = vmul.f32 %v1709, %v1069
        %v1774 = vmul.f32 %v1710, %v1070
        %v1775 = vmul.f32 %v1711, %v1071
        %v1776 = vadd.f32 %v1712, 0.0010179626
        %v1777 = vadd.f32 %v1713, 0.0010179626
        %v1778 = vadd.f32 %v1714, 0.0010179626
        %v1779 = vadd.f32 %v1715, 0.0010179626
        %v1780 = vadd.f32 %v1716, 0.0010179626
        %v1781 = vadd.f32 %v1717, 0.0010179626
        %v1782 = vadd.f32 %v1718, 0.0010179626
        %v1783 = vadd.f32 %v1719, 0.0010179626
        %v1784 = vadd.f32 %v1720, 0.0010179626
        %v1785 = vadd.f32 %v1721, 0.0010179626
        %v1786 = vadd.f32 %v1722, 0.0010179626
        %v1787 = vadd.f32 %v1723, 0.0010179626
        %v1788 = vadd.f32 %v1724, 0.0010179626
        %v1789 = vadd.f32 %v1725, 0.0010179626
        %v1790 = vadd.f32 %v1726, 0.0010179626
        %v1791 = vadd.f32 %v1727, 0.0010179626
        %v1792 = vadd.f32 %v1728, 0.0010179626
        %v1793 = vadd.f32 %v1729, 0.0010179626
        %v1794 = vadd.f32 %v1730, 0.0010179626
        %v1795 = vadd.f32 %v1731, 0.0010179626
        %v1796 = vadd.f32 %v1732, 0.0010179626
        %v1797 = vadd.f32 %v1733, 0.0010179626
        %v1798 = vadd.f32 %v1734, 0.0010179626
        %v1799 = vadd.f32 %v1735, 0.0010179626
        %v1800 = vadd.f32 %v1736, 0.0010179626
        %v1801 = vadd.f32 %v1737, 0.0010179626
        %v1802 = vadd.f32 %v1738, 0.0010179626
        %v1803 = vadd.f32 %v1739, 0.0010179626
        %v1804 = vadd.f32 %v1740, 0.0010179626
        %v1805 = vadd.f32 %v1741, 0.0010179626
        %v1806 = vadd.f32 %v1742, 0.0010179626
        %v1807 = vadd.f32 %v1743, 0.0010179626
        %v1808 = vadd.f32 %v1744, 0.0010179626
        %v1809 = vadd.f32 %v1745, 0.0010179626
        %v1810 = vadd.f32 %v1746, 0.0010179626
        %v1811 = vadd.f32 %v1747, 0.0010179626
        %v1812 = vadd.f32 %v1748, 0.0010179626
        %v1813 = vadd.f32 %v1749, 0.0010179626
        %v1814 = vadd.f32 %v1750, 0.0010179626
        %v1815 = vadd.f32 %v1751, 0.0010179626
        %v1816 = vadd.f32 %v1752, 0.0010179626
        %v1817 = vadd.f32 %v1753, 0.0010179626
        %v1818 = vadd.f32 %v1754, 0.0010179626
        %v1819 = vadd.f32 %v1755, 0.0010179626
        %v1820 = vadd.f32 %v1756, 0.0010179626
        %v1821 = vadd.f32 %v1757, 0.0010179626
        %v1822 = vadd.f32 %v1758, 0.0010179626
        %v1823 = vadd.f32 %v1759, 0.0010179626
        %v1824 = vadd.f32 %v1760, 0.0010179626
        %v1825 = vadd.f32 %v1761, 0.0010179626
        %v1826 = vadd.f32 %v1762, 0.0010179626
        %v1827 = vadd.f32 %v1763, 0.0010179626
        %v1828 = vadd.f32 %v1764, 0.0010179626
        %v1829 = vadd.f32 %v1765, 0.0010179626
        %v1830 = vadd.f32 %v1766, 0.0010179626
        %v1831 = vadd.f32 %v1767, 0.0010179626
        %v1832 = vadd.f32 %v1768, 0.0010179626
        %v1833 = vadd.f32 %v1769, 0.0010179626
        %v1834 = vadd.f32 %v1770, 0.0010179626
        %v1835 = vadd.f32 %v1771, 0.0010179626
        %v1836 = vadd.f32 %v1772, 0.0010179626
        %v1837 = vadd.f32 %v1773, 0.0010179626
        %v1838 = vadd.f32 %v1774, 0.0010179626
        %v1839 = vadd.f32 %v1775, 0.0010179626
        %v1840 = vmul.f32 %v1776, %v1008
        %v1841 = vmul.f32 %v1777, %v1009
        %v1842 = vmul.f32 %v1778, %v1010
        %v1843 = vmul.f32 %v1779, %v1011
        %v1844 = vmul.f32 %v1780, %v1012
        %v1845 = vmul.f32 %v1781, %v1013
        %v1846 = vmul.f32 %v1782, %v1014
        %v1847 = vmul.f32 %v1783, %v1015
        %v1848 = vmul.f32 %v1784, %v1016
        %v1849 = vmul.f32 %v1785, %v1017
        %v1850 = vmul.f32 %v1786, %v1018
        %v1851 = vmul.f32 %v1787, %v1019
        %v1852 = vmul.f32 %v1788, %v1020
        %v1853 = vmul.f32 %v1789, %v1021
        %v1854 = vmul.f32 %v1790, %v1022
        %v1855 = vmul.f32 %v1791, %v1023
        %v1856 = vmul.f32 %v1792, %v1024
        %v1857 = vmul.f32 %v1793, %v1025
        %v1858 = vmul.f32 %v1794, %v1026
        %v1859 = vmul.f32 %v1795, %v1027
        %v1860 = vmul.f32 %v1796, %v1028
        %v1861 = vmul.f32 %v1797, %v1029
        %v1862 = vmul.f32 %v1798, %v1030
        %v1863 = vmul.f32 %v1799, %v1031
        %v1864 = vmul.f32 %v1800, %v1032
        %v1865 = vmul.f32 %v1801, %v1033
        %v1866 = vmul.f32 %v1802, %v1034
        %v1867 = vmul.f32 %v1803, %v1035
        %v1868 = vmul.f32 %v1804, %v1036
        %v1869 = vmul.f32 %v1805, %v1037
        %v1870 = vmul.f32 %v1806, %v1038
        %v1871 = vmul.f32 %v1807, %v1039
        %v1872 = vmul.f32 %v1808, %v1040
        %v1873 = vmul.f32 %v1809, %v1041
        %v1874 = vmul.f32 %v1810, %v1042
        %v1875 = vmul.f32 %v1811, %v1043
        %v1876 = vmul.f32 %v1812, %v1044
        %v1877 = vmul.f32 %v1813, %v1045
        %v1878 = vmul.f32 %v1814, %v1046
        %v1879 = vmul.f32 %v1815, %v1047
        %v1880 = vmul.f32 %v1816, %v1048
        %v1881 = vmul.f32 %v1817, %v1049
        %v1882 = vmul.f32 %v1818, %v1050
        %v1883 = vmul.f32 %v1819, %v1051
        %v1884 = vmul.f32 %v1820, %v1052
        %v1885 = vmul.f32 %v1821, %v1053
        %v1886 = vmul.f32 %v1822, %v1054
        %v1887 = vmul.f32 %v1823, %v1055
        %v1888 = vmul.f32 %v1824, %v1056
        %v1889 = vmul.f32 %v1825, %v1057
        %v1890 = vmul.f32 %v1826, %v1058
        %v1891 = vmul.f32 %v1827, %v1059
        %v1892 = vmul.f32 %v1828, %v1060
        %v1893 = vmul.f32 %v1829, %v1061
        %v1894 = vmul.f32 %v1830, %v1062
        %v1895 = vmul.f32 %v1831, %v1063
        %v1896 = vmul.f32 %v1832, %v1064
        %v1897 = vmul.f32 %v1833, %v1065
        %v1898 = vmul.f32 %v1834, %v1066
        %v1899 = vmul.f32 %v1835, %v1067
        %v1900 = vmul.f32 %v1836, %v1068
        %v1901 = vmul.f32 %v1837, %v1069
        %v1902 = vmul.f32 %v1838, %v1070
        %v1903 = vmul.f32 %v1839, %v1071
        %v1904 = vadd.f32 %v1840, 0.01407047
        %v1905 = vadd.f32 %v1841, 0.01407047
        %v1906 = vadd.f32 %v1842, 0.01407047
        %v1907 = vadd.f32 %v1843, 0.01407047
        %v1908 = vadd.f32 %v1844, 0.01407047
        %v1909 = vadd.f32 %v1845, 0.01407047
        %v1910 = vadd.f32 %v1846, 0.01407047
        %v1911 = vadd.f32 %v1847, 0.01407047
        %v1912 = vadd.f32 %v1848, 0.01407047
        %v1913 = vadd.f32 %v1849, 0.01407047
        %v1914 = vadd.f32 %v1850, 0.01407047
        %v1915 = vadd.f32 %v1851, 0.01407047
        %v1916 = vadd.f32 %v1852, 0.01407047
        %v1917 = vadd.f32 %v1853, 0.01407047
        %v1918 = vadd.f32 %v1854, 0.01407047
        %v1919 = vadd.f32 %v1855, 0.01407047
        %v1920 = vadd.f32 %v1856, 0.01407047
        %v1921 = vadd.f32 %v1857, 0.01407047
        %v1922 = vadd.f32 %v1858, 0.01407047
        %v1923 = vadd.f32 %v1859, 0.01407047
        %v1924 = vadd.f32 %v1860, 0.01407047
        %v1925 = vadd.f32 %v1861, 0.01407047
        %v1926 = vadd.f32 %v1862, 0.01407047
        %v1927 = vadd.f32 %v1863, 0.01407047
        %v1928 = vadd.f32 %v1864, 0.01407047
        %v1929 = vadd.f32 %v1865, 0.01407047
        %v1930 = vadd.f32 %v1866, 0.01407047
        %v1931 = vadd.f32 %v1867, 0.01407047
        %v1932 = vadd.f32 %v1868, 0.01407047
        %v1933 = vadd.f32 %v1869, 0.01407047
        %v1934 = vadd.f32 %v1870, 0.01407047
        %v1935 = vadd.f32 %v1871, 0.01407047
        %v1936 = vadd.f32 %v1872, 0.01407047
        %v1937 = vadd.f32 %v1873, 0.01407047
        %v1938 = vadd.f32 %v1874, 0.01407047
        %v1939 = vadd.f32 %v1875, 0.01407047
        %v1940 = vadd.f32 %v1876, 0.01407047
        %v1941 = vadd.f32 %v1877, 0.01407047
        %v1942 = vadd.f32 %v1878, 0.01407047
        %v1943 = vadd.f32 %v1879, 0.01407047
        %v1944 = vadd.f32 %v1880, 0.01407047
        %v1945 = vadd.f32 %v1881, 0.01407047
        %v1946 = vadd.f32 %v1882, 0.01407047
        %v1947 = vadd.f32 %v1883, 0.01407047
        %v1948 = vadd.f32 %v1884, 0.01407047
        %v1949 = vadd.f32 %v1885, 0.01407047
        %v1950 = vadd.f32 %v1886, 0.01407047
        %v1951 = vadd.f32 %v1887, 0.01407047
        %v1952 = vadd.f32 %v1888, 0.01407047
        %v1953 = vadd.f32 %v1889, 0.01407047
        %v1954 = vadd.f32 %v1890, 0.01407047
        %v1955 = vadd.f32 %v1891, 0.01407047
        %v1956 = vadd.f32 %v1892, 0.01407047
        %v1957 = vadd.f32 %v1893, 0.01407047
        %v1958 = vadd.f32 %v1894, 0.01407047
        %v1959 = vadd.f32 %v1895, 0.01407047
        %v1960 = vadd.f32 %v1896, 0.01407047
        %v1961 = vadd.f32 %v1897, 0.01407047
        %v1962 = vadd.f32 %v1898, 0.01407047
        %v1963 = vadd.f32 %v1899, 0.01407047
        %v1964 = vadd.f32 %v1900, 0.01407047
        %v1965 = vadd.f32 %v1901, 0.01407047
        %v1966 = vadd.f32 %v1902, 0.01407047
        %v1967 = vadd.f32 %v1903, 0.01407047
        %v1968 = vmul.f32 %v1904, %v1008
        %v1969 = vmul.f32 %v1905, %v1009
        %v1970 = vmul.f32 %v1906, %v1010
        %v1971 = vmul.f32 %v1907, %v1011
        %v1972 = vmul.f32 %v1908, %v1012
        %v1973 = vmul.f32 %v1909, %v1013
        %v1974 = vmul.f32 %v1910, %v1014
        %v1975 = vmul.f32 %v1911, %v1015
        %v1976 = vmul.f32 %v1912, %v1016
        %v1977 = vmul.f32 %v1913, %v1017
        %v1978 = vmul.f32 %v1914, %v1018
        %v1979 = vmul.f32 %v1915, %v1019
        %v1980 = vmul.f32 %v1916, %v1020
        %v1981 = vmul.f32 %v1917, %v1021
        %v1982 = vmul.f32 %v1918, %v1022
        %v1983 = vmul.f32 %v1919, %v1023
        %v1984 = vmul.f32 %v1920, %v1024
        %v1985 = vmul.f32 %v1921, %v1025
        %v1986 = vmul.f32 %v1922, %v1026
        %v1987 = vmul.f32 %v1923, %v1027
        %v1988 = vmul.f32 %v1924, %v1028
        %v1989 = vmul.f32 %v1925, %v1029
        %v1990 = vmul.f32 %v1926, %v1030
        %v1991 = vmul.f32 %v1927, %v1031
        %v1992 = vmul.f32 %v1928, %v1032
        %v1993 = vmul.f32 %v1929, %v1033
        %v1994 = vmul.f32 %v1930, %v1034
        %v1995 = vmul.f32 %v1931, %v1035
        %v1996 = vmul.f32 %v1932, %v1036
        %v1997 = vmul.f32 %v1933, %v1037
        %v1998 = vmul.f32 %v1934, %v1038
        %v1999 = vmul.f32 %v1935, %v1039
        %v2000 = vmul.f32 %v1936, %v1040
        %v2001 = vmul.f32 %v1937, %v1041
        %v2002 = vmul.f32 %v1938, %v1042
        %v2003 = vmul.f32 %v1939, %v1043
        %v2004 = vmul.f32 %v1940, %v1044
        %v2005 = vmul.f32 %v1941, %v1045
        %v2006 = vmul.f32 %v1942, %v1046
        %v2007 = vmul.f32 %v1943, %v1047
        %v2008 = vmul.f32 %v1944, %v1048
        %v2009 = vmul.f32 %v1945, %v1049
        %v2010 = vmul.f32 %v1946, %v1050
        %v2011 = vmul.f32 %v1947, %v1051
        %v2012 = vmul.f32 %v1948, %v1052
        %v2013 = vmul.f32 %v1949, %v1053
        %v2014 = vmul.f32 %v1950, %v1054
        %v2015 = vmul.f32 %v1951, %v1055
        %v2016 = vmul.f32 %v1952, %v1056
        %v2017 = vmul.f32 %v1953, %v1057
        %v2018 = vmul.f32 %v1954, %v1058
        %v2019 = vmul.f32 %v1955, %v1059
        %v2020 = vmul.f32 %v1956, %v1060
        %v2021 = vmul.f32 %v1957, %v1061
        %v2022 = vmul.f32 %v1958, %v1062
        %v2023 = vmul.f32 %v1959, %v1063
        %v2024 = vmul.f32 %v1960, %v1064
        %v2025 = vmul.f32 %v1961, %v1065
        %v2026 = vmul.f32 %v1962, %v1066
        %v2027 = vmul.f32 %v1963, %v1067
        %v2028 = vmul.f32 %v1964, %v1068
        %v2029 = vmul.f32 %v1965, %v1069
        %v2030 = vmul.f32 %v1966, %v1070
        %v2031 = vmul.f32 %v1967, %v1071
        %v2032 = vadd.f32 %v1968, 0.11098505
        %v2033 = vadd.f32 %v1969, 0.11098505
        %v2034 = vadd.f32 %v1970, 0.11098505
        %v2035 = vadd.f32 %v1971, 0.11098505
        %v2036 = vadd.f32 %v1972, 0.11098505
        %v2037 = vadd.f32 %v1973, 0.11098505
        %v2038 = vadd.f32 %v1974, 0.11098505
        %v2039 = vadd.f32 %v1975, 0.11098505
        %v2040 = vadd.f32 %v1976, 0.11098505
        %v2041 = vadd.f32 %v1977, 0.11098505
        %v2042 = vadd.f32 %v1978, 0.11098505
        %v2043 = vadd.f32 %v1979, 0.11098505
        %v2044 = vadd.f32 %v1980, 0.11098505
        %v2045 = vadd.f32 %v1981, 0.11098505
        %v2046 = vadd.f32 %v1982, 0.11098505
        %v2047 = vadd.f32 %v1983, 0.11098505
        %v2048 = vadd.f32 %v1984, 0.11098505
        %v2049 = vadd.f32 %v1985, 0.11098505
        %v2050 = vadd.f32 %v1986, 0.11098505
        %v2051 = vadd.f32 %v1987, 0.11098505
        %v2052 = vadd.f32 %v1988, 0.11098505
        %v2053 = vadd.f32 %v1989, 0.11098505
        %v2054 = vadd.f32 %v1990, 0.11098505
        %v2055 = vadd.f32 %v1991, 0.11098505
        %v2056 = vadd.f32 %v1992, 0.11098505
        %v2057 = vadd.f32 %v1993, 0.11098505
        %v2058 = vadd.f32 %v1994, 0.11098505
        %v2059 = vadd.f32 %v1995, 0.11098505
        %v2060 = vadd.f32 %v1996, 0.11098505
        %v2061 = vadd.f32 %v1997, 0.11098505
        %v2062 = vadd.f32 %v1998, 0.11098505
        %v2063 = vadd.f32 %v1999, 0.11098505
        %v2064 = vadd.f32 %v2000, 0.11098505
        %v2065 = vadd.f32 %v2001, 0.11098505
        %v2066 = vadd.f32 %v2002, 0.11098505
        %v2067 = vadd.f32 %v2003, 0.11098505
        %v2068 = vadd.f32 %v2004, 0.11098505
        %v2069 = vadd.f32 %v2005, 0.11098505
        %v2070 = vadd.f32 %v2006, 0.11098505
        %v2071 = vadd.f32 %v2007, 0.11098505
        %v2072 = vadd.f32 %v2008, 0.11098505
        %v2073 = vadd.f32 %v2009, 0.11098505
        %v2074 = vadd.f32 %v2010, 0.11098505
        %v2075 = vadd.f32 %v2011, 0.11098505
        %v2076 = vadd.f32 %v2012, 0.11098505
        %v2077 = vadd.f32 %v2013, 0.11098505
        %v2078 = vadd.f32 %v2014, 0.11098505
        %v2079 = vadd.f32 %v2015, 0.11098505
        %v2080 = vadd.f32 %v2016, 0.11098505
        %v2081 = vadd.f32 %v2017, 0.11098505
        %v2082 = vadd.f32 %v2018, 0.11098505
        %v2083 = vadd.f32 %v2019, 0.11098505
        %v2084 = vadd.f32 %v2020, 0.11098505
        %v2085 = vadd.f32 %v2021, 0.11098505
        %v2086 = vadd.f32 %v2022, 0.11098505
        %v2087 = vadd.f32 %v2023, 0.11098505
        %v2088 = vadd.f32 %v2024, 0.11098505
        %v2089 = vadd.f32 %v2025, 0.11098505
        %v2090 = vadd.f32 %v2026, 0.11098505
        %v2091 = vadd.f32 %v2027, 0.11098505
        %v2092 = vadd.f32 %v2028, 0.11098505
        %v2093 = vadd.f32 %v2029, 0.11098505
        %v2094 = vadd.f32 %v2030, 0.11098505
        %v2095 = vadd.f32 %v2031, 0.11098505
        %v2096 = vmul.f32 %v2032, %v1008
        %v2097 = vmul.f32 %v2033, %v1009
        %v2098 = vmul.f32 %v2034, %v1010
        %v2099 = vmul.f32 %v2035, %v1011
        %v2100 = vmul.f32 %v2036, %v1012
        %v2101 = vmul.f32 %v2037, %v1013
        %v2102 = vmul.f32 %v2038, %v1014
        %v2103 = vmul.f32 %v2039, %v1015
        %v2104 = vmul.f32 %v2040, %v1016
        %v2105 = vmul.f32 %v2041, %v1017
        %v2106 = vmul.f32 %v2042, %v1018
        %v2107 = vmul.f32 %v2043, %v1019
        %v2108 = vmul.f32 %v2044, %v1020
        %v2109 = vmul.f32 %v2045, %v1021
        %v2110 = vmul.f32 %v2046, %v1022
        %v2111 = vmul.f32 %v2047, %v1023
        %v2112 = vmul.f32 %v2048, %v1024
        %v2113 = vmul.f32 %v2049, %v1025
        %v2114 = vmul.f32 %v2050, %v1026
        %v2115 = vmul.f32 %v2051, %v1027
        %v2116 = vmul.f32 %v2052, %v1028
        %v2117 = vmul.f32 %v2053, %v1029
        %v2118 = vmul.f32 %v2054, %v1030
        %v2119 = vmul.f32 %v2055, %v1031
        %v2120 = vmul.f32 %v2056, %v1032
        %v2121 = vmul.f32 %v2057, %v1033
        %v2122 = vmul.f32 %v2058, %v1034
        %v2123 = vmul.f32 %v2059, %v1035
        %v2124 = vmul.f32 %v2060, %v1036
        %v2125 = vmul.f32 %v2061, %v1037
        %v2126 = vmul.f32 %v2062, %v1038
        %v2127 = vmul.f32 %v2063, %v1039
        %v2128 = vmul.f32 %v2064, %v1040
        %v2129 = vmul.f32 %v2065, %v1041
        %v2130 = vmul.f32 %v2066, %v1042
        %v2131 = vmul.f32 %v2067, %v1043
        %v2132 = vmul.f32 %v2068, %v1044
        %v2133 = vmul.f32 %v2069, %v1045
        %v2134 = vmul.f32 %v2070, %v1046
        %v2135 = vmul.f32 %v2071, %v1047
        %v2136 = vmul.f32 %v2072, %v1048
        %v2137 = vmul.f32 %v2073, %v1049
        %v2138 = vmul.f32 %v2074, %v1050
        %v2139 = vmul.f32 %v2075, %v1051
        %v2140 = vmul.f32 %v2076, %v1052
        %v2141 = vmul.f32 %v2077, %v1053
        %v2142 = vmul.f32 %v2078, %v1054
        %v2143 = vmul.f32 %v2079, %v1055
        %v2144 = vmul.f32 %v2080, %v1056
        %v2145 = vmul.f32 %v2081, %v1057
        %v2146 = vmul.f32 %v2082, %v1058
        %v2147 = vmul.f32 %v2083, %v1059
        %v2148 = vmul.f32 %v2084, %v1060
        %v2149 = vmul.f32 %v2085, %v1061
        %v2150 = vmul.f32 %v2086, %v1062
        %v2151 = vmul.f32 %v2087, %v1063
        %v2152 = vmul.f32 %v2088, %v1064
        %v2153 = vmul.f32 %v2089, %v1065
        %v2154 = vmul.f32 %v2090, %v1066
        %v2155 = vmul.f32 %v2091, %v1067
        %v2156 = vmul.f32 %v2092, %v1068
        %v2157 = vmul.f32 %v2093, %v1069
        %v2158 = vmul.f32 %v2094, %v1070
        %v2159 = vmul.f32 %v2095, %v1071
        %v2160 = vadd.f32 %v2096, 0.49746925
        %v2161 = vadd.f32 %v2097, 0.49746925
        %v2162 = vadd.f32 %v2098, 0.49746925
        %v2163 = vadd.f32 %v2099, 0.49746925
        %v2164 = vadd.f32 %v2100, 0.49746925
        %v2165 = vadd.f32 %v2101, 0.49746925
        %v2166 = vadd.f32 %v2102, 0.49746925
        %v2167 = vadd.f32 %v2103, 0.49746925
        %v2168 = vadd.f32 %v2104, 0.49746925
        %v2169 = vadd.f32 %v2105, 0.49746925
        %v2170 = vadd.f32 %v2106, 0.49746925
        %v2171 = vadd.f32 %v2107, 0.49746925
        %v2172 = vadd.f32 %v2108, 0.49746925
        %v2173 = vadd.f32 %v2109, 0.49746925
        %v2174 = vadd.f32 %v2110, 0.49746925
        %v2175 = vadd.f32 %v2111, 0.49746925
        %v2176 = vadd.f32 %v2112, 0.49746925
        %v2177 = vadd.f32 %v2113, 0.49746925
        %v2178 = vadd.f32 %v2114, 0.49746925
        %v2179 = vadd.f32 %v2115, 0.49746925
        %v2180 = vadd.f32 %v2116, 0.49746925
        %v2181 = vadd.f32 %v2117, 0.49746925
        %v2182 = vadd.f32 %v2118, 0.49746925
        %v2183 = vadd.f32 %v2119, 0.49746925
        %v2184 = vadd.f32 %v2120, 0.49746925
        %v2185 = vadd.f32 %v2121, 0.49746925
        %v2186 = vadd.f32 %v2122, 0.49746925
        %v2187 = vadd.f32 %v2123, 0.49746925
        %v2188 = vadd.f32 %v2124, 0.49746925
        %v2189 = vadd.f32 %v2125, 0.49746925
        %v2190 = vadd.f32 %v2126, 0.49746925
        %v2191 = vadd.f32 %v2127, 0.49746925
        %v2192 = vadd.f32 %v2128, 0.49746925
        %v2193 = vadd.f32 %v2129, 0.49746925
        %v2194 = vadd.f32 %v2130, 0.49746925
        %v2195 = vadd.f32 %v2131, 0.49746925
        %v2196 = vadd.f32 %v2132, 0.49746925
        %v2197 = vadd.f32 %v2133, 0.49746925
        %v2198 = vadd.f32 %v2134, 0.49746925
        %v2199 = vadd.f32 %v2135, 0.49746925
        %v2200 = vadd.f32 %v2136, 0.49746925
        %v2201 = vadd.f32 %v2137, 0.49746925
        %v2202 = vadd.f32 %v2138, 0.49746925
        %v2203 = vadd.f32 %v2139, 0.49746925
        %v2204 = vadd.f32 %v2140, 0.49746925
        %v2205 = vadd.f32 %v2141, 0.49746925
        %v2206 = vadd.f32 %v2142, 0.49746925
        %v2207 = vadd.f32 %v2143, 0.49746925
        %v2208 = vadd.f32 %v2144, 0.49746925
        %v2209 = vadd.f32 %v2145, 0.49746925
        %v2210 = vadd.f32 %v2146, 0.49746925
        %v2211 = vadd.f32 %v2147, 0.49746925
        %v2212 = vadd.f32 %v2148, 0.49746925
        %v2213 = vadd.f32 %v2149, 0.49746925
        %v2214 = vadd.f32 %v2150, 0.49746925
        %v2215 = vadd.f32 %v2151, 0.49746925
        %v2216 = vadd.f32 %v2152, 0.49746925
        %v2217 = vadd.f32 %v2153, 0.49746925
        %v2218 = vadd.f32 %v2154, 0.49746925
        %v2219 = vadd.f32 %v2155, 0.49746925
        %v2220 = vadd.f32 %v2156, 0.49746925
        %v2221 = vadd.f32 %v2157, 0.49746925
        %v2222 = vadd.f32 %v2158, 0.49746925
        %v2223 = vadd.f32 %v2159, 0.49746925
        %v2224 = vmul.f32 %v2160, %v1008
        %v2225 = vmul.f32 %v2161, %v1009
        %v2226 = vmul.f32 %v2162, %v1010
        %v2227 = vmul.f32 %v2163, %v1011
        %v2228 = vmul.f32 %v2164, %v1012
        %v2229 = vmul.f32 %v2165, %v1013
        %v2230 = vmul.f32 %v2166, %v1014
        %v2231 = vmul.f32 %v2167, %v1015
        %v2232 = vmul.f32 %v2168, %v1016
        %v2233 = vmul.f32 %v2169, %v1017
        %v2234 = vmul.f32 %v2170, %v1018
        %v2235 = vmul.f32 %v2171, %v1019
        %v2236 = vmul.f32 %v2172, %v1020
        %v2237 = vmul.f32 %v2173, %v1021
        %v2238 = vmul.f32 %v2174, %v1022
        %v2239 = vmul.f32 %v2175, %v1023
        %v2240 = vmul.f32 %v2176, %v1024
        %v2241 = vmul.f32 %v2177, %v1025
        %v2242 = vmul.f32 %v2178, %v1026
        %v2243 = vmul.f32 %v2179, %v1027
        %v2244 = vmul.f32 %v2180, %v1028
        %v2245 = vmul.f32 %v2181, %v1029
        %v2246 = vmul.f32 %v2182, %v1030
        %v2247 = vmul.f32 %v2183, %v1031
        %v2248 = vmul.f32 %v2184, %v1032
        %v2249 = vmul.f32 %v2185, %v1033
        %v2250 = vmul.f32 %v2186, %v1034
        %v2251 = vmul.f32 %v2187, %v1035
        %v2252 = vmul.f32 %v2188, %v1036
        %v2253 = vmul.f32 %v2189, %v1037
        %v2254 = vmul.f32 %v2190, %v1038
        %v2255 = vmul.f32 %v2191, %v1039
        %v2256 = vmul.f32 %v2192, %v1040
        %v2257 = vmul.f32 %v2193, %v1041
        %v2258 = vmul.f32 %v2194, %v1042
        %v2259 = vmul.f32 %v2195, %v1043
        %v2260 = vmul.f32 %v2196, %v1044
        %v2261 = vmul.f32 %v2197, %v1045
        %v2262 = vmul.f32 %v2198, %v1046
        %v2263 = vmul.f32 %v2199, %v1047
        %v2264 = vmul.f32 %v2200, %v1048
        %v2265 = vmul.f32 %v2201, %v1049
        %v2266 = vmul.f32 %v2202, %v1050
        %v2267 = vmul.f32 %v2203, %v1051
        %v2268 = vmul.f32 %v2204, %v1052
        %v2269 = vmul.f32 %v2205, %v1053
        %v2270 = vmul.f32 %v2206, %v1054
        %v2271 = vmul.f32 %v2207, %v1055
        %v2272 = vmul.f32 %v2208, %v1056
        %v2273 = vmul.f32 %v2209, %v1057
        %v2274 = vmul.f32 %v2210, %v1058
        %v2275 = vmul.f32 %v2211, %v1059
        %v2276 = vmul.f32 %v2212, %v1060
        %v2277 = vmul.f32 %v2213, %v1061
        %v2278 = vmul.f32 %v2214, %v1062
        %v2279 = vmul.f32 %v2215, %v1063
        %v2280 = vmul.f32 %v2216, %v1064
        %v2281 = vmul.f32 %v2217, %v1065
        %v2282 = vmul.f32 %v2218, %v1066
        %v2283 = vmul.f32 %v2219, %v1067
        %v2284 = vmul.f32 %v2220, %v1068
        %v2285 = vmul.f32 %v2221, %v1069
        %v2286 = vmul.f32 %v2222, %v1070
        %v2287 = vmul.f32 %v2223, %v1071
        %v2288 = vadd.f32 %v2224, 1.0
        %v2289 = vadd.f32 %v2225, 1.0
        %v2290 = vadd.f32 %v2226, 1.0
        %v2291 = vadd.f32 %v2227, 1.0
        %v2292 = vadd.f32 %v2228, 1.0
        %v2293 = vadd.f32 %v2229, 1.0
        %v2294 = vadd.f32 %v2230, 1.0
        %v2295 = vadd.f32 %v2231, 1.0
        %v2296 = vadd.f32 %v2232, 1.0
        %v2297 = vadd.f32 %v2233, 1.0
        %v2298 = vadd.f32 %v2234, 1.0
        %v2299 = vadd.f32 %v2235, 1.0
        %v2300 = vadd.f32 %v2236, 1.0
        %v2301 = vadd.f32 %v2237, 1.0
        %v2302 = vadd.f32 %v2238, 1.0
        %v2303 = vadd.f32 %v2239, 1.0
        %v2304 = vadd.f32 %v2240, 1.0
        %v2305 = vadd.f32 %v2241, 1.0
        %v2306 = vadd.f32 %v2242, 1.0
        %v2307 = vadd.f32 %v2243, 1.0
        %v2308 = vadd.f32 %v2244, 1.0
        %v2309 = vadd.f32 %v2245, 1.0
        %v2310 = vadd.f32 %v2246, 1.0
        %v2311 = vadd.f32 %v2247, 1.0
        %v2312 = vadd.f32 %v2248, 1.0
        %v2313 = vadd.f32 %v2249, 1.0
        %v2314 = vadd.f32 %v2250, 1.0
        %v2315 = vadd.f32 %v2251, 1.0
        %v2316 = vadd.f32 %v2252, 1.0
        %v2317 = vadd.f32 %v2253, 1.0
        %v2318 = vadd.f32 %v2254, 1.0
        %v2319 = vadd.f32 %v2255, 1.0
        %v2320 = vadd.f32 %v2256, 1.0
        %v2321 = vadd.f32 %v2257, 1.0
        %v2322 = vadd.f32 %v2258, 1.0
        %v2323 = vadd.f32 %v2259, 1.0
        %v2324 = vadd.f32 %v2260, 1.0
        %v2325 = vadd.f32 %v2261, 1.0
        %v2326 = vadd.f32 %v2262, 1.0
        %v2327 = vadd.f32 %v2263, 1.0
        %v2328 = vadd.f32 %v2264, 1.0
        %v2329 = vadd.f32 %v2265, 1.0
        %v2330 = vadd.f32 %v2266, 1.0
        %v2331 = vadd.f32 %v2267, 1.0
        %v2332 = vadd.f32 %v2268, 1.0
        %v2333 = vadd.f32 %v2269, 1.0
        %v2334 = vadd.f32 %v2270, 1.0
        %v2335 = vadd.f32 %v2271, 1.0
        %v2336 = vadd.f32 %v2272, 1.0
        %v2337 = vadd.f32 %v2273, 1.0
        %v2338 = vadd.f32 %v2274, 1.0
        %v2339 = vadd.f32 %v2275, 1.0
        %v2340 = vadd.f32 %v2276, 1.0
        %v2341 = vadd.f32 %v2277, 1.0
        %v2342 = vadd.f32 %v2278, 1.0
        %v2343 = vadd.f32 %v2279, 1.0
        %v2344 = vadd.f32 %v2280, 1.0
        %v2345 = vadd.f32 %v2281, 1.0
        %v2346 = vadd.f32 %v2282, 1.0
        %v2347 = vadd.f32 %v2283, 1.0
        %v2348 = vadd.f32 %v2284, 1.0
        %v2349 = vadd.f32 %v2285, 1.0
        %v2350 = vadd.f32 %v2286, 1.0
        %v2351 = vadd.f32 %v2287, 1.0
        %v2352 = vmul.f32 %v944, %v1520
        %v2353 = vmul.f32 %v945, %v1521
        %v2354 = vmul.f32 %v946, %v1522
        %v2355 = vmul.f32 %v947, %v1523
        %v2356 = vmul.f32 %v948, %v1524
        %v2357 = vmul.f32 %v949, %v1525
        %v2358 = vmul.f32 %v950, %v1526
        %v2359 = vmul.f32 %v951, %v1527
        %v2360 = vmul.f32 %v952, %v1528
        %v2361 = vmul.f32 %v953, %v1529
        %v2362 = vmul.f32 %v954, %v1530
        %v2363 = vmul.f32 %v955, %v1531
        %v2364 = vmul.f32 %v956, %v1532
        %v2365 = vmul.f32 %v957, %v1533
        %v2366 = vmul.f32 %v958, %v1534
        %v2367 = vmul.f32 %v959, %v1535
        %v2368 = vmul.f32 %v960, %v1536
        %v2369 = vmul.f32 %v961, %v1537
        %v2370 = vmul.f32 %v962, %v1538
        %v2371 = vmul.f32 %v963, %v1539
        %v2372 = vmul.f32 %v964, %v1540
        %v2373 = vmul.f32 %v965, %v1541
        %v2374 = vmul.f32 %v966, %v1542
        %v2375 = vmul.f32 %v967, %v1543
        %v2376 = vmul.f32 %v968, %v1544
        %v2377 = vmul.f32 %v969, %v1545
        %v2378 = vmul.f32 %v970, %v1546
        %v2379 = vmul.f32 %v971, %v1547
        %v2380 = vmul.f32 %v972, %v1548
        %v2381 = vmul.f32 %v973, %v1549
        %v2382 = vmul.f32 %v974, %v1550
        %v2383 = vmul.f32 %v975, %v1551
        %v2384 = vmul.f32 %v976, %v1552
        %v2385 = vmul.f32 %v977, %v1553
        %v2386 = vmul.f32 %v978, %v1554
        %v2387 = vmul.f32 %v979, %v1555
        %v2388 = vmul.f32 %v980, %v1556
        %v2389 = vmul.f32 %v981, %v1557
        %v2390 = vmul.f32 %v982, %v1558
        %v2391 = vmul.f32 %v983, %v1559
        %v2392 = vmul.f32 %v984, %v1560
        %v2393 = vmul.f32 %v985, %v1561
        %v2394 = vmul.f32 %v986, %v1562
        %v2395 = vmul.f32 %v987, %v1563
        %v2396 = vmul.f32 %v988, %v1564
        %v2397 = vmul.f32 %v989, %v1565
        %v2398 = vmul.f32 %v990, %v1566
        %v2399 = vmul.f32 %v991, %v1567
        %v2400 = vmul.f32 %v992, %v1568
        %v2401 = vmul.f32 %v993, %v1569
        %v2402 = vmul.f32 %v994, %v1570
        %v2403 = vmul.f32 %v995, %v1571
        %v2404 = vmul.f32 %v996, %v1572
        %v2405 = vmul.f32 %v997, %v1573
        %v2406 = vmul.f32 %v998, %v1574
        %v2407 = vmul.f32 %v999, %v1575
        %v2408 = vmul.f32 %v1000, %v1576
        %v2409 = vmul.f32 %v1001, %v1577
        %v2410 = vmul.f32 %v1002, %v1578
        %v2411 = vmul.f32 %v1003, %v1579
        %v2412 = vmul.f32 %v1004, %v1580
        %v2413 = vmul.f32 %v1005, %v1581
        %v2414 = vmul.f32 %v1006, %v1582
        %v2415 = vmul.f32 %v1007, %v1583
        %v2416 = vrcp.pop %v2288
        %v2417 = vmul.f32 %v2352, %v2416
        %v2418 = vrcp.pop %v2289
        %v2419 = vmul.f32 %v2353, %v2418
        %v2420 = vrcp.pop %v2290
        %v2421 = vmul.f32 %v2354, %v2420
        %v2422 = vrcp.pop %v2291
        %v2423 = vmul.f32 %v2355, %v2422
        %v2424 = vrcp.pop %v2292
        %v2425 = vmul.f32 %v2356, %v2424
        %v2426 = vrcp.pop %v2293
        %v2427 = vmul.f32 %v2357, %v2426
        %v2428 = vrcp.pop %v2294
        %v2429 = vmul.f32 %v2358, %v2428
        %v2430 = vrcp.pop %v2295
        %v2431 = vmul.f32 %v2359, %v2430
        %v2432 = vrcp.pop %v2296
        %v2433 = vmul.f32 %v2360, %v2432
        %v2434 = vrcp.pop %v2297
        %v2435 = vmul.f32 %v2361, %v2434
        %v2436 = vrcp.pop %v2298
        %v2437 = vmul.f32 %v2362, %v2436
        %v2438 = vrcp.pop %v2299
        %v2439 = vmul.f32 %v2363, %v2438
        %v2440 = vrcp.pop %v2300
        %v2441 = vmul.f32 %v2364, %v2440
        %v2442 = vrcp.pop %v2301
        %v2443 = vmul.f32 %v2365, %v2442
        %v2444 = vrcp.pop %v2302
        %v2445 = vmul.f32 %v2366, %v2444
        %v2446 = vrcp.pop %v2303
        %v2447 = vmul.f32 %v2367, %v2446
        %v2448 = vrcp.pop %v2304
        %v2449 = vmul.f32 %v2368, %v2448
        %v2450 = vrcp.pop %v2305
        %v2451 = vmul.f32 %v2369, %v2450
        %v2452 = vrcp.pop %v2306
        %v2453 = vmul.f32 %v2370, %v2452
        %v2454 = vrcp.pop %v2307
        %v2455 = vmul.f32 %v2371, %v2454
        %v2456 = vrcp.pop %v2308
        %v2457 = vmul.f32 %v2372, %v2456
        %v2458 = vrcp.pop %v2309
        %v2459 = vmul.f32 %v2373, %v2458
        %v2460 = vrcp.pop %v2310
        %v2461 = vmul.f32 %v2374, %v2460
        %v2462 = vrcp.pop %v2311
        %v2463 = vmul.f32 %v2375, %v2462
        %v2464 = vrcp.pop %v2312
        %v2465 = vmul.f32 %v2376, %v2464
        %v2466 = vrcp.pop %v2313
        %v2467 = vmul.f32 %v2377, %v2466
        %v2468 = vrcp.pop %v2314
        %v2469 = vmul.f32 %v2378, %v2468
        %v2470 = vrcp.pop %v2315
        %v2471 = vmul.f32 %v2379, %v2470
        %v2472 = vrcp.pop %v2316
        %v2473 = vmul.f32 %v2380, %v2472
        %v2474 = vrcp.pop %v2317
        %v2475 = vmul.f32 %v2381, %v2474
        %v2476 = vrcp.pop %v2318
        %v2477 = vmul.f32 %v2382, %v2476
        %v2478 = vrcp.pop %v2319
        %v2479 = vmul.f32 %v2383, %v2478
        %v2480 = vrcp.pop %v2320
        %v2481 = vmul.f32 %v2384, %v2480
        %v2482 = vrcp.pop %v2321
        %v2483 = vmul.f32 %v2385, %v2482
        %v2484 = vrcp.pop %v2322
        %v2485 = vmul.f32 %v2386, %v2484
        %v2486 = vrcp.pop %v2323
        %v2487 = vmul.f32 %v2387, %v2486
        %v2488 = vrcp.pop %v2324
        %v2489 = vmul.f32 %v2388, %v2488
        %v2490 = vrcp.pop %v2325
        %v2491 = vmul.f32 %v2389, %v2490
        %v2492 = vrcp.pop %v2326
        %v2493 = vmul.f32 %v2390, %v2492
        %v2494 = vrcp.pop %v2327
        %v2495 = vmul.f32 %v2391, %v2494
        %v2496 = vrcp.pop %v2328
        %v2497 = vmul.f32 %v2392, %v2496
        %v2498 = vrcp.pop %v2329
        %v2499 = vmul.f32 %v2393, %v2498
        %v2500 = vrcp.pop %v2330
        %v2501 = vmul.f32 %v2394, %v2500
        %v2502 = vrcp.pop %v2331
        %v2503 = vmul.f32 %v2395, %v2502
        %v2504 = vrcp.pop %v2332
        %v2505 = vmul.f32 %v2396, %v2504
        %v2506 = vrcp.pop %v2333
        %v2507 = vmul.f32 %v2397, %v2506
        %v2508 = vrcp.pop %v2334
        %v2509 = vmul.f32 %v2398, %v2508
        %v2510 = vrcp.pop %v2335
        %v2511 = vmul.f32 %v2399, %v2510
        %v2512 = vrcp.pop %v2336
        %v2513 = vmul.f32 %v2400, %v2512
        %v2514 = vrcp.pop %v2337
        %v2515 = vmul.f32 %v2401, %v2514
        %v2516 = vrcp.pop %v2338
        %v2517 = vmul.f32 %v2402, %v2516
        %v2518 = vrcp.pop %v2339
        %v2519 = vmul.f32 %v2403, %v2518
        %v2520 = vrcp.pop %v2340
        %v2521 = vmul.f32 %v2404, %v2520
        %v2522 = vrcp.pop %v2341
        %v2523 = vmul.f32 %v2405, %v2522
        %v2524 = vrcp.pop %v2342
        %v2525 = vmul.f32 %v2406, %v2524
        %v2526 = vrcp.pop %v2343
        %v2527 = vmul.f32 %v2407, %v2526
        %v2528 = vrcp.pop %v2344
        %v2529 = vmul.f32 %v2408, %v2528
        %v2530 = vrcp.pop %v2345
        %v2531 = vmul.f32 %v2409, %v2530
        %v2532 = vrcp.pop %v2346
        %v2533 = vmul.f32 %v2410, %v2532
        %v2534 = vrcp.pop %v2347
        %v2535 = vmul.f32 %v2411, %v2534
        %v2536 = vrcp.pop %v2348
        %v2537 = vmul.f32 %v2412, %v2536
        %v2538 = vrcp.pop %v2349
        %v2539 = vmul.f32 %v2413, %v2538
        %v2540 = vrcp.pop %v2350
        %v2541 = vmul.f32 %v2414, %v2540
        %v2542 = vrcp.pop %v2351
        %v2543 = vmul.f32 %v2415, %v2542
        %v2544 = vadd.f32 %v2417, 1.0
        %v2545 = vadd.f32 %v2419, 1.0
        %v2546 = vadd.f32 %v2421, 1.0
        %v2547 = vadd.f32 %v2423, 1.0
        %v2548 = vadd.f32 %v2425, 1.0
        %v2549 = vadd.f32 %v2427, 1.0
        %v2550 = vadd.f32 %v2429, 1.0
        %v2551 = vadd.f32 %v2431, 1.0
        %v2552 = vadd.f32 %v2433, 1.0
        %v2553 = vadd.f32 %v2435, 1.0
        %v2554 = vadd.f32 %v2437, 1.0
        %v2555 = vadd.f32 %v2439, 1.0
        %v2556 = vadd.f32 %v2441, 1.0
        %v2557 = vadd.f32 %v2443, 1.0
        %v2558 = vadd.f32 %v2445, 1.0
        %v2559 = vadd.f32 %v2447, 1.0
        %v2560 = vadd.f32 %v2449, 1.0
        %v2561 = vadd.f32 %v2451, 1.0
        %v2562 = vadd.f32 %v2453, 1.0
        %v2563 = vadd.f32 %v2455, 1.0
        %v2564 = vadd.f32 %v2457, 1.0
        %v2565 = vadd.f32 %v2459, 1.0
        %v2566 = vadd.f32 %v2461, 1.0
        %v2567 = vadd.f32 %v2463, 1.0
        %v2568 = vadd.f32 %v2465, 1.0
        %v2569 = vadd.f32 %v2467, 1.0
        %v2570 = vadd.f32 %v2469, 1.0
        %v2571 = vadd.f32 %v2471, 1.0
        %v2572 = vadd.f32 %v2473, 1.0
        %v2573 = vadd.f32 %v2475, 1.0
        %v2574 = vadd.f32 %v2477, 1.0
        %v2575 = vadd.f32 %v2479, 1.0
        %v2576 = vadd.f32 %v2481, 1.0
        %v2577 = vadd.f32 %v2483, 1.0
        %v2578 = vadd.f32 %v2485, 1.0
        %v2579 = vadd.f32 %v2487, 1.0
        %v2580 = vadd.f32 %v2489, 1.0
        %v2581 = vadd.f32 %v2491, 1.0
        %v2582 = vadd.f32 %v2493, 1.0
        %v2583 = vadd.f32 %v2495, 1.0
        %v2584 = vadd.f32 %v2497, 1.0
        %v2585 = vadd.f32 %v2499, 1.0
        %v2586 = vadd.f32 %v2501, 1.0
        %v2587 = vadd.f32 %v2503, 1.0
        %v2588 = vadd.f32 %v2505, 1.0
        %v2589 = vadd.f32 %v2507, 1.0
        %v2590 = vadd.f32 %v2509, 1.0
        %v2591 = vadd.f32 %v2511, 1.0
        %v2592 = vadd.f32 %v2513, 1.0
        %v2593 = vadd.f32 %v2515, 1.0
        %v2594 = vadd.f32 %v2517, 1.0
        %v2595 = vadd.f32 %v2519, 1.0
        %v2596 = vadd.f32 %v2521, 1.0
        %v2597 = vadd.f32 %v2523, 1.0
        %v2598 = vadd.f32 %v2525, 1.0
        %v2599 = vadd.f32 %v2527, 1.0
        %v2600 = vadd.f32 %v2529, 1.0
        %v2601 = vadd.f32 %v2531, 1.0
        %v2602 = vadd.f32 %v2533, 1.0
        %v2603 = vadd.f32 %v2535, 1.0
        %v2604 = vadd.f32 %v2537, 1.0
        %v2605 = vadd.f32 %v2539, 1.0
        %v2606 = vadd.f32 %v2541, 1.0
        %v2607 = vadd.f32 %v2543, 1.0
        %v2608 = vmul.f32 %v752, %v2544
        %v2609 = vmul.f32 %v753, %v2545
        %v2610 = vmul.f32 %v754, %v2546
        %v2611 = vmul.f32 %v755, %v2547
        %v2612 = vmul.f32 %v756, %v2548
        %v2613 = vmul.f32 %v757, %v2549
        %v2614 = vmul.f32 %v758, %v2550
        %v2615 = vmul.f32 %v759, %v2551
        %v2616 = vmul.f32 %v760, %v2552
        %v2617 = vmul.f32 %v761, %v2553
        %v2618 = vmul.f32 %v762, %v2554
        %v2619 = vmul.f32 %v763, %v2555
        %v2620 = vmul.f32 %v764, %v2556
        %v2621 = vmul.f32 %v765, %v2557
        %v2622 = vmul.f32 %v766, %v2558
        %v2623 = vmul.f32 %v767, %v2559
        %v2624 = vmul.f32 %v768, %v2560
        %v2625 = vmul.f32 %v769, %v2561
        %v2626 = vmul.f32 %v770, %v2562
        %v2627 = vmul.f32 %v771, %v2563
        %v2628 = vmul.f32 %v772, %v2564
        %v2629 = vmul.f32 %v773, %v2565
        %v2630 = vmul.f32 %v774, %v2566
        %v2631 = vmul.f32 %v775, %v2567
        %v2632 = vmul.f32 %v776, %v2568
        %v2633 = vmul.f32 %v777, %v2569
        %v2634 = vmul.f32 %v778, %v2570
        %v2635 = vmul.f32 %v779, %v2571
        %v2636 = vmul.f32 %v780, %v2572
        %v2637 = vmul.f32 %v781, %v2573
        %v2638 = vmul.f32 %v782, %v2574
        %v2639 = vmul.f32 %v783, %v2575
        %v2640 = vmul.f32 %v784, %v2576
        %v2641 = vmul.f32 %v785, %v2577
        %v2642 = vmul.f32 %v786, %v2578
        %v2643 = vmul.f32 %v787, %v2579
        %v2644 = vmul.f32 %v788, %v2580
        %v2645 = vmul.f32 %v789, %v2581
        %v2646 = vmul.f32 %v790, %v2582
        %v2647 = vmul.f32 %v791, %v2583
        %v2648 = vmul.f32 %v792, %v2584
        %v2649 = vmul.f32 %v793, %v2585
        %v2650 = vmul.f32 %v794, %v2586
        %v2651 = vmul.f32 %v795, %v2587
        %v2652 = vmul.f32 %v796, %v2588
        %v2653 = vmul.f32 %v797, %v2589
        %v2654 = vmul.f32 %v798, %v2590
        %v2655 = vmul.f32 %v799, %v2591
        %v2656 = vmul.f32 %v800, %v2592
        %v2657 = vmul.f32 %v801, %v2593
        %v2658 = vmul.f32 %v802, %v2594
        %v2659 = vmul.f32 %v803, %v2595
        %v2660 = vmul.f32 %v804, %v2596
        %v2661 = vmul.f32 %v805, %v2597
        %v2662 = vmul.f32 %v806, %v2598
        %v2663 = vmul.f32 %v807, %v2599
        %v2664 = vmul.f32 %v808, %v2600
        %v2665 = vmul.f32 %v809, %v2601
        %v2666 = vmul.f32 %v810, %v2602
        %v2667 = vmul.f32 %v811, %v2603
        %v2668 = vmul.f32 %v812, %v2604
        %v2669 = vmul.f32 %v813, %v2605
        %v2670 = vmul.f32 %v814, %v2606
        %v2671 = vmul.f32 %v815, %v2607
        %v2672 = vpack.c.bf16 %v2612, %v2608
        %v2673 = vpack.c.bf16 %v2613, %v2609
        %v2674 = vpack.c.bf16 %v2614, %v2610
        %v2675 = vpack.c.bf16 %v2615, %v2611
        %v2676 = vpack.c.bf16 %v2620, %v2616
        %v2677 = vpack.c.bf16 %v2621, %v2617
        %v2678 = vpack.c.bf16 %v2622, %v2618
        %v2679 = vpack.c.bf16 %v2623, %v2619
        %v2680 = vpack.c.bf16 %v2628, %v2624
        %v2681 = vpack.c.bf16 %v2629, %v2625
        %v2682 = vpack.c.bf16 %v2630, %v2626
        %v2683 = vpack.c.bf16 %v2631, %v2627
        %v2684 = vpack.c.bf16 %v2636, %v2632
        %v2685 = vpack.c.bf16 %v2637, %v2633
        %v2686 = vpack.c.bf16 %v2638, %v2634
        %v2687 = vpack.c.bf16 %v2639, %v2635
        %v2688 = vpack.c.bf16 %v2644, %v2640
        %v2689 = vpack.c.bf16 %v2645, %v2641
        %v2690 = vpack.c.bf16 %v2646, %v2642
        %v2691 = vpack.c.bf16 %v2647, %v2643
        %v2692 = vpack.c.bf16 %v2652, %v2648
        %v2693 = vpack.c.bf16 %v2653, %v2649
        %v2694 = vpack.c.bf16 %v2654, %v2650
        %v2695 = vpack.c.bf16 %v2655, %v2651
        %v2696 = vpack.c.bf16 %v2660, %v2656
        %v2697 = vpack.c.bf16 %v2661, %v2657
        %v2698 = vpack.c.bf16 %v2662, %v2658
        %v2699 = vpack.c.bf16 %v2663, %v2659
        %v2700 = vpack.c.bf16 %v2668, %v2664
        %v2701 = vpack.c.bf16 %v2669, %v2665
        %v2702 = vpack.c.bf16 %v2670, %v2666
        %v2703 = vpack.c.bf16 %v2671, %v2667
        %v2704 = vld [vmem:[#allocation8] sm:$0xf]
        %v2705 = vld [vmem:[#allocation8 + $0x4] sm:$0xf]
        %v2706 = vld [vmem:[#allocation8 + $0x8] sm:$0xf]
        %v2707 = vld [vmem:[#allocation8 + $0xc] sm:$0xf]
        %v2708 = vld [vmem:[#allocation8 + $0x10] sm:$0xf]
        %v2709 = vld [vmem:[#allocation8 + $0x14] sm:$0xf]
        %v2710 = vld [vmem:[#allocation8 + $0x18] sm:$0xf]
        %v2711 = vld [vmem:[#allocation8 + $0x1c] sm:$0xf]
        %v2712 = vld [vmem:[#allocation8 + $0x20] sm:$0xf]
        %v2713 = vld [vmem:[#allocation8 + $0x24] sm:$0xf]
        %v2714 = vld [vmem:[#allocation8 + $0x28] sm:$0xf]
        %v2715 = vld [vmem:[#allocation8 + $0x2c] sm:$0xf]
        %v2716 = vld [vmem:[#allocation8 + $0x30] sm:$0xf]
        %v2717 = vld [vmem:[#allocation8 + $0x34] sm:$0xf]
        %v2718 = vld [vmem:[#allocation8 + $0x38] sm:$0xf]
        %v2719 = vld [vmem:[#allocation8 + $0x3c] sm:$0xf]
        %v2720 = vld [vmem:[#allocation8 + $0x40] sm:$0xf]
        %v2721 = vld [vmem:[#allocation8 + $0x44] sm:$0xf]
        %v2722 = vld [vmem:[#allocation8 + $0x48] sm:$0xf]
        %v2723 = vld [vmem:[#allocation8 + $0x4c] sm:$0xf]
        %v2724 = vld [vmem:[#allocation8 + $0x50] sm:$0xf]
        %v2725 = vld [vmem:[#allocation8 + $0x54] sm:$0xf]
        %v2726 = vld [vmem:[#allocation8 + $0x58] sm:$0xf]
        %v2727 = vld [vmem:[#allocation8 + $0x5c] sm:$0xf]
        %v2728 = vld [vmem:[#allocation8 + $0x60] sm:$0xf]
        %v2729 = vld [vmem:[#allocation8 + $0x64] sm:$0xf]
        %v2730 = vld [vmem:[#allocation8 + $0x68] sm:$0xf]
        %v2731 = vld [vmem:[#allocation8 + $0x6c] sm:$0xf]
        %v2732 = vld [vmem:[#allocation8 + $0x70] sm:$0xf]
        %v2733 = vld [vmem:[#allocation8 + $0x74] sm:$0xf]
        %v2734 = vld [vmem:[#allocation8 + $0x78] sm:$0xf]
        %v2735 = vld [vmem:[#allocation8 + $0x7c] sm:$0xf]
        %v2736 = vld [vmem:[#allocation8 + $0x80] sm:$0xf]
        %v2737 = vld [vmem:[#allocation8 + $0x84] sm:$0xf]
        %v2738 = vld [vmem:[#allocation8 + $0x88] sm:$0xf]
        %v2739 = vld [vmem:[#allocation8 + $0x8c] sm:$0xf]
        %v2740 = vld [vmem:[#allocation8 + $0x90] sm:$0xf]
        %v2741 = vld [vmem:[#allocation8 + $0x94] sm:$0xf]
        %v2742 = vld [vmem:[#allocation8 + $0x98] sm:$0xf]
        %v2743 = vld [vmem:[#allocation8 + $0x9c] sm:$0xf]
        %v2744 = vld [vmem:[#allocation8 + $0xa0] sm:$0xf]
        %v2745 = vld [vmem:[#allocation8 + $0xa4] sm:$0xf]
        %v2746 = vld [vmem:[#allocation8 + $0xa8] sm:$0xf]
        %v2747 = vld [vmem:[#allocation8 + $0xac] sm:$0xf]
        %v2748 = vld [vmem:[#allocation8 + $0xb0] sm:$0xf]
        %v2749 = vld [vmem:[#allocation8 + $0xb4] sm:$0xf]
        %v2750 = vld [vmem:[#allocation8 + $0xb8] sm:$0xf]
        %v2751 = vld [vmem:[#allocation8 + $0xbc] sm:$0xf]
        %v2752 = vld [vmem:[#allocation8 + $0xc0] sm:$0xf]
        %v2753 = vld [vmem:[#allocation8 + $0xc4] sm:$0xf]
        %v2754 = vld [vmem:[#allocation8 + $0xc8] sm:$0xf]
        %v2755 = vld [vmem:[#allocation8 + $0xcc] sm:$0xf]
        %v2756 = vld [vmem:[#allocation8 + $0xd0] sm:$0xf]
        %v2757 = vld [vmem:[#allocation8 + $0xd4] sm:$0xf]
        %v2758 = vld [vmem:[#allocation8 + $0xd8] sm:$0xf]
        %v2759 = vld [vmem:[#allocation8 + $0xdc] sm:$0xf]
        %v2760 = vld [vmem:[#allocation8 + $0xe0] sm:$0xf]
        %v2761 = vld [vmem:[#allocation8 + $0xe4] sm:$0xf]
        %v2762 = vld [vmem:[#allocation8 + $0xe8] sm:$0xf]
        %v2763 = vld [vmem:[#allocation8 + $0xec] sm:$0xf]
        %v2764 = vld [vmem:[#allocation8 + $0xf0] sm:$0xf]
        %v2765 = vld [vmem:[#allocation8 + $0xf4] sm:$0xf]
        %v2766 = vld [vmem:[#allocation8 + $0xf8] sm:$0xf]
        %v2767 = vld [vmem:[#allocation8 + $0xfc] sm:$0xf]
        %v2768 = vld [vmem:[%s4] sm:$0x1]
        %v2770 = vlaneseq
        %v2771 = vshrl.u32 %v2770, 7
        %v2772 = vsub.s32 0, %v2771
        %v2773 = vrot.slane %v2768, %v2772
        %v2839 = vunpack.c.l.b16 %v2704
        %v2840 = vunpack.c.l.b16 %v2705
        %v2841 = vunpack.c.l.b16 %v2706
        %v2842 = vunpack.c.l.b16 %v2707
        %v2843 = vunpack.c.l.b16 %v2708
        %v2844 = vunpack.c.l.b16 %v2709
        %v2845 = vunpack.c.l.b16 %v2710
        %v2846 = vunpack.c.l.b16 %v2711
        %v2847 = vunpack.c.l.b16 %v2712
        %v2848 = vunpack.c.l.b16 %v2713
        %v2849 = vunpack.c.l.b16 %v2714
        %v2850 = vunpack.c.l.b16 %v2715
        %v2851 = vunpack.c.l.b16 %v2716
        %v2852 = vunpack.c.l.b16 %v2717
        %v2853 = vunpack.c.l.b16 %v2718
        %v2854 = vunpack.c.l.b16 %v2719
        %v2855 = vunpack.c.l.b16 %v2720
        %v2856 = vunpack.c.l.b16 %v2721
        %v2857 = vunpack.c.l.b16 %v2722
        %v2858 = vunpack.c.l.b16 %v2723
        %v2859 = vunpack.c.l.b16 %v2724
        %v2860 = vunpack.c.l.b16 %v2725
        %v2861 = vunpack.c.l.b16 %v2726
        %v2862 = vunpack.c.l.b16 %v2727
        %v2863 = vunpack.c.l.b16 %v2728
        %v2864 = vunpack.c.l.b16 %v2729
        %v2865 = vunpack.c.l.b16 %v2730
        %v2866 = vunpack.c.l.b16 %v2731
        %v2867 = vunpack.c.l.b16 %v2732
        %v2868 = vunpack.c.l.b16 %v2733
        %v2869 = vunpack.c.l.b16 %v2734
        %v2870 = vunpack.c.l.b16 %v2735
        %v2871 = vunpack.c.l.b16 %v2736
        %v2872 = vunpack.c.l.b16 %v2737
        %v2873 = vunpack.c.l.b16 %v2738
        %v2874 = vunpack.c.l.b16 %v2739
        %v2875 = vunpack.c.l.b16 %v2740
        %v2876 = vunpack.c.l.b16 %v2741
        %v2877 = vunpack.c.l.b16 %v2742
        %v2878 = vunpack.c.l.b16 %v2743
        %v2879 = vunpack.c.l.b16 %v2744
        %v2880 = vunpack.c.l.b16 %v2745
        %v2881 = vunpack.c.l.b16 %v2746
        %v2882 = vunpack.c.l.b16 %v2747
        %v2883 = vunpack.c.l.b16 %v2748
        %v2884 = vunpack.c.l.b16 %v2749
        %v2885 = vunpack.c.l.b16 %v2750
        %v2886 = vunpack.c.l.b16 %v2751
        %v2887 = vunpack.c.l.b16 %v2752
        %v2888 = vunpack.c.l.b16 %v2753
        %v2889 = vunpack.c.l.b16 %v2754
        %v2890 = vunpack.c.l.b16 %v2755
        %v2891 = vunpack.c.l.b16 %v2756
        %v2892 = vunpack.c.l.b16 %v2757
        %v2893 = vunpack.c.l.b16 %v2758
        %v2894 = vunpack.c.l.b16 %v2759
        %v2895 = vunpack.c.l.b16 %v2760
        %v2896 = vunpack.c.l.b16 %v2761
        %v2897 = vunpack.c.l.b16 %v2762
        %v2898 = vunpack.c.l.b16 %v2763
        %v2899 = vunpack.c.l.b16 %v2764
        %v2900 = vunpack.c.l.b16 %v2765
        %v2901 = vunpack.c.l.b16 %v2766
        %v2902 = vunpack.c.l.b16 %v2767
        %v2903 = vpack.c.b16 %v2840, %v2839
        %v2904 = vpack.c.b16 %v2842, %v2841
        %v2905 = vpack.c.b16 %v2844, %v2843
        %v2906 = vpack.c.b16 %v2846, %v2845
        %v2907 = vpack.c.b16 %v2848, %v2847
        %v2908 = vpack.c.b16 %v2850, %v2849
        %v2909 = vpack.c.b16 %v2852, %v2851
        %v2910 = vpack.c.b16 %v2854, %v2853
        %v2911 = vpack.c.b16 %v2856, %v2855
        %v2912 = vpack.c.b16 %v2858, %v2857
        %v2913 = vpack.c.b16 %v2860, %v2859
        %v2914 = vpack.c.b16 %v2862, %v2861
        %v2915 = vpack.c.b16 %v2864, %v2863
        %v2916 = vpack.c.b16 %v2866, %v2865
        %v2917 = vpack.c.b16 %v2868, %v2867
        %v2918 = vpack.c.b16 %v2870, %v2869
        %v2919 = vpack.c.b16 %v2872, %v2871
        %v2920 = vpack.c.b16 %v2874, %v2873
        %v2921 = vpack.c.b16 %v2876, %v2875
        %v2922 = vpack.c.b16 %v2878, %v2877
        %v2923 = vpack.c.b16 %v2880, %v2879
        %v2924 = vpack.c.b16 %v2882, %v2881
        %v2925 = vpack.c.b16 %v2884, %v2883
        %v2926 = vpack.c.b16 %v2886, %v2885
        %v2927 = vpack.c.b16 %v2888, %v2887
        %v2928 = vpack.c.b16 %v2890, %v2889
        %v2929 = vpack.c.b16 %v2892, %v2891
        %v2930 = vpack.c.b16 %v2894, %v2893
        %v2931 = vpack.c.b16 %v2896, %v2895
        %v2932 = vpack.c.b16 %v2898, %v2897
        %v2933 = vpack.c.b16 %v2900, %v2899
        %v2934 = vpack.c.b16 %v2902, %v2901
        %2967 = vmatprep.subr.bf16.mxu0 0
        %2968 = vmatpush1.bf16.msra.mxu0 %v2910
        %2969 = vmatprep.subr.bf16.mxu0 0
        %2970 = vmatpush1.bf16.msra.mxu0 %v2909
        %2971 = vmatprep.subr.bf16.mxu0 0
        %2972 = vmatpush1.bf16.msra.mxu0 %v2908
        %2973 = vmatprep.subr.bf16.mxu0 0
        %2974 = vmatpush1.bf16.msra.mxu0 %v2907
        %2975 = vmatprep.subr.bf16.mxu0 0
        %2976 = vmatpush1.bf16.msra.mxu0 %v2906
        %2977 = vmatprep.subr.bf16.mxu0 0
        %2978 = vmatpush1.bf16.msra.mxu0 %v2905
        %2979 = vmatprep.subr.bf16.mxu0 0
        %2980 = vmatpush1.bf16.msra.mxu0 %v2904
        %2981 = vmatprep.subr.bf16.mxu0 0
        %2982 = vmatpush1.bf16.msra.mxu0 %v2903
        %2983 = vmatprep.subr.bf16.mxu0 0
        %2984 = vmatpush2.bf16.msra.mxu0 %v2918
        %2985 = vmatprep.subr.bf16.mxu0 0
        %2986 = vmatpush2.bf16.msra.mxu0 %v2917
        %2987 = vmatprep.subr.bf16.mxu0 0
        %2988 = vmatpush2.bf16.msra.mxu0 %v2916
        %2989 = vmatprep.subr.bf16.mxu0 0
        %2990 = vmatpush2.bf16.msra.mxu0 %v2915
        %2991 = vmatprep.subr.bf16.mxu0 0
        %2992 = vmatpush2.bf16.msra.mxu0 %v2914
        %2993 = vmatprep.subr.bf16.mxu0 0
        %2994 = vmatpush2.bf16.msra.mxu0 %v2913
        %2995 = vmatprep.subr.bf16.mxu0 0
        %2996 = vmatpush2.bf16.msra.mxu0 %v2912
        %2997 = vmatprep.subr.bf16.mxu0 0
        %2998 = vmatpush2.bf16.msra.mxu0 %v2911
        %2999 = vmatprep.mubr.bf16.mxu0 %v2673
        %3000 = vmatmul.mubr.bf16.gmra.mxu0 %v2672
        %v3001 = vpop.f32.mrf.mxu0
        %v3002 = vadd.f32 %v2773, %v3001
        %v3003 = vpop.f32.mrf.mxu0
        %v3004 = vpop.f32.mrf.mxu0
        %v3005 = vadd.f32 %v2773, %v3004
        %v3006 = vpop.f32.mrf.mxu0
        %3007 = vmatprep.mubr.bf16.mxu0 %v2677
        %3008 = vmatmul.mubr.bf16.gmra.mxu0 %v2676
        %v3009 = vpop.f32.mrf.mxu0
        %v3010 = vadd.f32 %v2773, %v3009
        %v3011 = vpop.f32.mrf.mxu0
        %v3012 = vpop.f32.mrf.mxu0
        %v3013 = vadd.f32 %v2773, %v3012
        %v3014 = vpop.f32.mrf.mxu0
        %3015 = vmatprep.mubr.bf16.mxu0 %v2681
        %3016 = vmatmul.mubr.bf16.gmra.mxu0 %v2680
        %v3017 = vpop.f32.mrf.mxu0
        %v3018 = vadd.f32 %v2773, %v3017
        %v3019 = vpop.f32.mrf.mxu0
        %v3020 = vpop.f32.mrf.mxu0
        %v3021 = vadd.f32 %v2773, %v3020
        %v3022 = vpop.f32.mrf.mxu0
        %3023 = vmatprep.mubr.bf16.mxu0 %v2685
        %3024 = vmatmul.mubr.bf16.gmra.mxu0 %v2684
        %v3025 = vpop.f32.mrf.mxu0
        %v3026 = vadd.f32 %v2773, %v3025
        %v3027 = vpop.f32.mrf.mxu0
        %v3028 = vpop.f32.mrf.mxu0
        %v3029 = vadd.f32 %v2773, %v3028
        %v3030 = vpop.f32.mrf.mxu0
        %3031 = vmatprep.mubr.bf16.mxu0 %v2689
        %3032 = vmatmul.mubr.bf16.gmra.mxu0 %v2688
        %v3033 = vpop.f32.mrf.mxu0
        %v3034 = vadd.f32 %v2773, %v3033
        %v3035 = vpop.f32.mrf.mxu0
        %v3036 = vpop.f32.mrf.mxu0
        %v3037 = vadd.f32 %v2773, %v3036
        %v3038 = vpop.f32.mrf.mxu0
        %3039 = vmatprep.mubr.bf16.mxu0 %v2693
        %3040 = vmatmul.mubr.bf16.gmra.mxu0 %v2692
        %v3041 = vpop.f32.mrf.mxu0
        %v3042 = vadd.f32 %v2773, %v3041
        %v3043 = vpop.f32.mrf.mxu0
        %v3044 = vpop.f32.mrf.mxu0
        %v3045 = vadd.f32 %v2773, %v3044
        %v3046 = vpop.f32.mrf.mxu0
        %3047 = vmatprep.mubr.bf16.mxu0 %v2697
        %3048 = vmatmul.mubr.bf16.gmra.mxu0 %v2696
        %v3049 = vpop.f32.mrf.mxu0
        %v3050 = vadd.f32 %v2773, %v3049
        %v3051 = vpop.f32.mrf.mxu0
        %v3052 = vpop.f32.mrf.mxu0
        %v3053 = vadd.f32 %v2773, %v3052
        %v3054 = vpop.f32.mrf.mxu0
        %3055 = vmatprep.mubr.bf16.mxu0 %v2701
        %3056 = vmatmul.mubr.bf16.gmra.mxu0 %v2700
        %v3057 = vpop.f32.mrf.mxu0
        %v3058 = vadd.f32 %v2773, %v3057
        %v3059 = vpop.f32.mrf.mxu0
        %v3060 = vpop.f32.mrf.mxu0
        %v3061 = vadd.f32 %v2773, %v3060
        %v3062 = vpop.f32.mrf.mxu0
        %3063 = vdwg.mxu0
        %3064 = vmatprep.subr.bf16.mxu0 0
        %3065 = vmatpush1.bf16.msra.mxu0 %v2926
        %3066 = vmatprep.subr.bf16.mxu0 0
        %3067 = vmatpush1.bf16.msra.mxu0 %v2925
        %3068 = vmatprep.subr.bf16.mxu0 0
        %3069 = vmatpush1.bf16.msra.mxu0 %v2924
        %3070 = vmatprep.subr.bf16.mxu0 0
        %3071 = vmatpush1.bf16.msra.mxu0 %v2923
        %3072 = vmatprep.subr.bf16.mxu0 0
        %3073 = vmatpush1.bf16.msra.mxu0 %v2922
        %3074 = vmatprep.subr.bf16.mxu0 0
        %3075 = vmatpush1.bf16.msra.mxu0 %v2921
        %3076 = vmatprep.subr.bf16.mxu0 0
        %3077 = vmatpush1.bf16.msra.mxu0 %v2920
        %3078 = vmatprep.subr.bf16.mxu0 0
        %3079 = vmatpush1.bf16.msra.mxu0 %v2919
        %3080 = vmatprep.subr.bf16.mxu0 0
        %3081 = vmatpush2.bf16.msra.mxu0 %v2934
        %3082 = vmatprep.subr.bf16.mxu0 0
        %3083 = vmatpush2.bf16.msra.mxu0 %v2933
        %3084 = vmatprep.subr.bf16.mxu0 0
        %3085 = vmatpush2.bf16.msra.mxu0 %v2932
        %3086 = vmatprep.subr.bf16.mxu0 0
        %3087 = vmatpush2.bf16.msra.mxu0 %v2931
        %3088 = vmatprep.subr.bf16.mxu0 0
        %3089 = vmatpush2.bf16.msra.mxu0 %v2930
        %3090 = vmatprep.subr.bf16.mxu0 0
        %3091 = vmatpush2.bf16.msra.mxu0 %v2929
        %3092 = vmatprep.subr.bf16.mxu0 0
        %3093 = vmatpush2.bf16.msra.mxu0 %v2928
        %3094 = vmatprep.subr.bf16.mxu0 0
        %3095 = vmatpush2.bf16.msra.mxu0 %v2927
        %3096 = vmatprep.mubr.bf16.mxu0 %v2675
        %3097 = vmatmul.mubr.bf16.gmra.mxu0 %v2674
        %v3098 = vpop.f32.mrf.mxu0
        %v3099 = vadd.f32 %v3002, %v3098
        %v3100 = vpop.f32.mrf.mxu0
        %v3101 = vpop.f32.mrf.mxu0
        %v3102 = vadd.f32 %v3005, %v3101
        %v3103 = vpop.f32.mrf.mxu0
        %3104 = vmatprep.mubr.bf16.mxu0 %v2679
        %3105 = vmatmul.mubr.bf16.gmra.mxu0 %v2678
        %v3106 = vpop.f32.mrf.mxu0
        %v3107 = vadd.f32 %v3010, %v3106
        %v3108 = vpop.f32.mrf.mxu0
        %v3109 = vpop.f32.mrf.mxu0
        %v3110 = vadd.f32 %v3013, %v3109
        %v3111 = vpop.f32.mrf.mxu0
        %3112 = vmatprep.mubr.bf16.mxu0 %v2683
        %3113 = vmatmul.mubr.bf16.gmra.mxu0 %v2682
        %v3114 = vpop.f32.mrf.mxu0
        %v3115 = vadd.f32 %v3018, %v3114
        %v3116 = vpop.f32.mrf.mxu0
        %v3117 = vpop.f32.mrf.mxu0
        %v3118 = vadd.f32 %v3021, %v3117
        %v3119 = vpop.f32.mrf.mxu0
        %3120 = vmatprep.mubr.bf16.mxu0 %v2687
        %3121 = vmatmul.mubr.bf16.gmra.mxu0 %v2686
        %v3122 = vpop.f32.mrf.mxu0
        %v3123 = vadd.f32 %v3026, %v3122
        %v3124 = vpop.f32.mrf.mxu0
        %v3125 = vpop.f32.mrf.mxu0
        %v3126 = vadd.f32 %v3029, %v3125
        %v3127 = vpop.f32.mrf.mxu0
        %3128 = vmatprep.mubr.bf16.mxu0 %v2691
        %3129 = vmatmul.mubr.bf16.gmra.mxu0 %v2690
        %v3130 = vpop.f32.mrf.mxu0
        %v3131 = vadd.f32 %v3034, %v3130
        %v3132 = vpop.f32.mrf.mxu0
        %v3133 = vpop.f32.mrf.mxu0
        %v3134 = vadd.f32 %v3037, %v3133
        %v3135 = vpop.f32.mrf.mxu0
        %3136 = vmatprep.mubr.bf16.mxu0 %v2695
        %3137 = vmatmul.mubr.bf16.gmra.mxu0 %v2694
        %v3138 = vpop.f32.mrf.mxu0
        %v3139 = vadd.f32 %v3042, %v3138
        %v3140 = vpop.f32.mrf.mxu0
        %v3141 = vpop.f32.mrf.mxu0
        %v3142 = vadd.f32 %v3045, %v3141
        %v3143 = vpop.f32.mrf.mxu0
        %3144 = vmatprep.mubr.bf16.mxu0 %v2699
        %3145 = vmatmul.mubr.bf16.gmra.mxu0 %v2698
        %v3146 = vpop.f32.mrf.mxu0
        %v3147 = vadd.f32 %v3050, %v3146
        %v3148 = vpop.f32.mrf.mxu0
        %v3149 = vpop.f32.mrf.mxu0
        %v3150 = vadd.f32 %v3053, %v3149
        %v3151 = vpop.f32.mrf.mxu0
        %3152 = vmatprep.mubr.bf16.mxu0 %v2703
        %3153 = vmatmul.mubr.bf16.gmra.mxu0 %v2702
        %v3154 = vpop.f32.mrf.mxu0
        %v3155 = vadd.f32 %v3058, %v3154
        %v3156 = vpop.f32.mrf.mxu0
        %v3157 = vpop.f32.mrf.mxu0
        %v3158 = vadd.f32 %v3061, %v3157
        %v3159 = vpop.f32.mrf.mxu0
        %3160 = vdwg.mxu0
        %3161 = vst [vmem:[%s284] sm:$0xff] %v3099
        %3162 = vst [vmem:[%s284 + $0x8] sm:$0xff] %v3102
        %3163 = vst [vmem:[%s284 + $0x10] sm:$0xff] %v3107
        %3164 = vst [vmem:[%s284 + $0x18] sm:$0xff] %v3110
        %3165 = vst [vmem:[%s284 + $0x20] sm:$0xff] %v3115
        %3166 = vst [vmem:[%s284 + $0x28] sm:$0xff] %v3118
        %3167 = vst [vmem:[%s284 + $0x30] sm:$0xff] %v3123
        %3168 = vst [vmem:[%s284 + $0x38] sm:$0xff] %v3126
        %3169 = vst [vmem:[%s284 + $0x40] sm:$0xff] %v3131
        %3170 = vst [vmem:[%s284 + $0x48] sm:$0xff] %v3134
        %3171 = vst [vmem:[%s284 + $0x50] sm:$0xff] %v3139
        %3172 = vst [vmem:[%s284 + $0x58] sm:$0xff] %v3142
        %3173 = vst [vmem:[%s284 + $0x60] sm:$0xff] %v3147
        %3174 = vst [vmem:[%s284 + $0x68] sm:$0xff] %v3150
        %3175 = vst [vmem:[%s284 + $0x70] sm:$0xff] %v3155
        %3176 = vst [vmem:[%s284 + $0x78] sm:$0xff] %v3158
        %s3177 = sand.u32 %s142, 1
        %s3178 = scalar_lea.sflag [#allocation4], %s3177
        %s3179 = sand.u32 %s142, 1
        %s3180 = smul.addr %s3179, 128
        %s3181 = scalar_lea.vmem [#allocation10], %s3180
        // Predicated region
        $region57: #{tpu_custom_call.1} parent=39 // pred_check
          %p3182 = pneg %p152
        $region58: #{tpu_custom_call.1} parent=39 // pred_check_branch
          %3184 = sbr.rel (%p3182) target = $region60
        $region59: #{tpu_custom_call.1} parent=39 // pred_region
          %s3185 = smul.u32 16, %s24
          %s3187 = ssub.s32 2048, 2048
          %3188 = vsyncadd %s3178, %s3187
          %s3189 = smul.addr %s3185, 128
          %s3190 = scalar_lea.hbm %s5, %s3189
          %s3191 = sshll.u32 %s3181, 4
          %s3192 = int_to_ptr.vmem [resolvable:$true] %s3191
          %3197 = dma.vmem_to_hbm [thread:$0]  %s3192, 2048, %s3190, %s3178, 128, 128, 8
        $region60: #{tpu_custom_call.1} parent=39 // pred_fallthru
          _
      $region40: #{tpu_custom_call.1} parent=5 // pred_fallthru
        _
      %p3198 = scmp.le.s32.totalorder 2, %s19
      // Predicated region
      $region61: #{tpu_custom_call.1} parent=5 // pred_check
        %p3199 = pneg %p3198
      $region62: #{tpu_custom_call.1} parent=5 // pred_check_branch
        %3201 = sbr.rel (%p3199) target = $region64
      $region63: #{tpu_custom_call.1} parent=5 // pred_region
        %s3202 = ssub.s32 %s19, 2
        // Predicated region
        $region65: #{tpu_custom_call.1} parent=63 // pred_check
          %p3203 = pneg %p158
        $region66: #{tpu_custom_call.1} parent=63 // pred_check_branch
          %3205 = sbr.rel (%p3203) target = $region68
        $region67: #{tpu_custom_call.1} parent=63 // pred_region
          %s3206 = sand.u32 %s143, 1
          %s3207 = scalar_lea.sflag [#allocation4], %s3206
          %s3208 = sand.u32 %s143, 1
          %s3209 = smul.addr %s3208, 128
          %s3210 = scalar_lea.vmem [#allocation10], %s3209
          %3211 = dma.done %s3207, 2048
        $region68: #{tpu_custom_call.1} parent=63 // pred_fallthru
          _
      $region64: #{tpu_custom_call.1} parent=5 // pred_fallthru
        _
    $region6: #{tpu_custom_call.1} parent=1 // loop_footer
      %s23 = sadd.s32 1, %s19
    $region7: #{tpu_custom_call.1} parent=1 // loop_footer_branch
      %18 = sbr.rel target = $region3
    $region8: #{tpu_custom_call.1} parent=1 // loop_exit
      _
    %3212 = vsyncpa [#allocation3], 1
    %s3213 = scalar_lea.sflag [#allocation3], 1
    %3214 = vsyncpa %s3213, 1
    %3215 = vsyncpa [#allocation6], 1
    %3216 = vsyncpa [#allocation9], 1
    %3217 = vsyncpa [#allocation4], 1
    %s3218 = scalar_lea.sflag [#allocation4], 1
    %3219 = vsyncpa %s3218, 1

</llo_original>
